<compile_context>
chip_gen: v6e
topology: v6e:2x2x1
jax: 0.10.0
libtpu: 0.0.40
codegen_flags: <defaults>
</compile_context>

<pallas_src>
import math
import functools
import numpy as np
import jax
import jax.numpy as jnp
from jax import lax
from jax.experimental import pallas as pl
from jax.experimental.pallas import tpu as pltpu


# ----------------------------- model config ---------------------------------
DIM = 64
N_HEADS = 4
N_KV_HEADS = 2
HEAD_DIM = DIM // N_HEADS            # 16
N_REP = N_HEADS // N_KV_HEADS        # 2
KV_DIM = N_KV_HEADS * HEAD_DIM       # 32
QK_DIM = DIM + KV_DIM                # 96  ([q | k] columns)
MULTIPLE_OF = 32
NORM_EPS = 1e-5
SEQ = 16
BATCH = 2

def _ffn_hidden_dim(dim, multiple_of):
    hidden = 4 * dim
    hidden = int(2 * hidden / 3)
    return multiple_of * ((hidden + multiple_of - 1) // multiple_of)

HIDDEN = _ffn_hidden_dim(DIM, MULTIPLE_OF)   # 192
HIDDEN_PAD = 256                             # lane-dense padding of HIDDEN
QKVR_COLS = 256                              # lane-dense fused qkv(+rot) width
W_IN_COLS = QKVR_COLS + 2 * HIDDEN_PAD       # 768


# ------------------------------- kernel -------------------------------------
def _block_kernel(batch, seq, n_heads, n_kv_heads, head_dim, eps,
                  x_ref, misc_ref, w_in_ref, w_out_ref, o_ref):
    f32, bf16 = jnp.float32, jnp.bfloat16
    n_rep = n_heads // n_kv_heads
    dim = n_heads * head_dim             # 64
    kv_dim = n_kv_heads * head_dim       # 32
    qk = dim + kv_dim                    # 96
    bs = batch * seq                     # 32 rows (batch folded in)
    n_grp = n_heads * batch              # 8 (batch, head) attention groups
    rot_off = dim + 2 * kv_dim           # 128: start of [qR | kR] columns

    x = x_ref[...]                       # (bs, dim) f32 (residual path stays f32)

    # misc slab: plane 0 = [cos | attn_norm_w row], plane 1 = [sin | ffn_norm_w row]
    cos_plane = misc_ref[0]              # (bs+8, 128) f32
    sin_plane = misc_ref[1]
    cos = cos_plane[0:bs, 0:qk]
    sin = sin_plane[0:bs, 0:qk]
    attn_w = cos_plane[bs:bs + 1, 0:dim]     # (1, dim)
    ffn_w = sin_plane[bs:bs + 1, 0:dim]

    def rms_norm(v, w):                  # v f32, w (1, dim) broadcasts over rows
        ms = jnp.mean(v * v, axis=-1, keepdims=True)
        return v * lax.rsqrt(ms + eps) * w

    # -------- ONE fused projection (bf16 operands, f32 accumulation) --------
    # columns: [q | k | v | qR | kR | pad | w1-block(256) | w3-block(256)]
    proj = jnp.dot(x.astype(bf16), w_in_ref[...], preferred_element_type=f32)  # (bs, 768)

    base = proj[:, 0:qk]                                  # [q | k]    (bs, 96)
    v_all = proj[:, qk:qk + kv_dim]                       # v          (bs, 32)
    rot = proj[:, rot_off:rot_off + qk]                   # [qR | kR]  (bs, 96)

    # RoPE as a single elementwise FMA (1/sqrt(hd) already folded into wq cols)
    roped = base * cos + rot * sin
    q = roped[:, 0:dim]                  # (bs, 64)
    k = roped[:, dim:qk]                 # (bs, 32)

    # -------- pack heads along sublanes: row = h*bs + b*seq + s --------------
    q_p = jnp.concatenate(
        [q[:, h * head_dim:(h + 1) * head_dim] for h in range(n_heads)], axis=0)
    k_p = jnp.concatenate(
        [k[:, (h // n_rep) * head_dim:(h // n_rep + 1) * head_dim]
         for h in range(n_heads)], axis=0)                # repeat_kv folded in
    v_p = jnp.concatenate(
        [v_all[:, (h // n_rep) * head_dim:(h // n_rep + 1) * head_dim]
         for h in range(n_heads)], axis=0)

    # view as (group, seq, head_dim): group g = h*batch + b
    q3 = q_p.reshape(n_grp, seq, head_dim).astype(bf16)
    k3 = k_p.reshape(n_grp, seq, head_dim).astype(bf16)
    v3 = v_p.reshape(n_grp, seq, head_dim).astype(bf16)

    # -------- batched scores + causal softmax on (8,16,16) only --------------
    scores = jnp.einsum('gqd,gkd->gqk', q3, k3, preferred_element_type=f32)
    qi = lax.broadcasted_iota(jnp.int32, (n_grp, seq, seq), 1)
    ki = lax.broadcasted_iota(jnp.int32, (n_grp, seq, seq), 2)
    scores = jnp.where(ki <= qi, scores, jnp.float32(-1e30))   # mask in f32
    m = jnp.max(scores, axis=-1, keepdims=True)
    p = jnp.exp(scores - m)
    p = p * pl.reciprocal(jnp.sum(p, axis=-1, keepdims=True), approx=True)

    out3 = jnp.einsum('gqk,gkd->gqd', p.astype(bf16), v3, preferred_element_type=f32)
    out_p = out3.reshape(n_grp * seq, head_dim)           # (128, 16)

    # -------- unpack heads back to lanes, ONE K=dim matmul with wo ------------
    attn_cat = jnp.concatenate(
        [out_p[h * bs:(h + 1) * bs, :] for h in range(n_heads)], axis=1)  # (bs, dim)
    attn = jnp.dot(attn_cat.astype(bf16), w_out_ref[0:dim, :],
                   preferred_element_type=f32)

    h_res = x + rms_norm(attn, attn_w)   # h = x + attn_norm(attn(x))

    # -------- feed-forward on x (per the forward's final, overriding line) ---
    g = proj[:, QKVR_COLS:QKVR_COLS + HIDDEN_PAD]                   # [x@w1 | 0]
    u = proj[:, QKVR_COLS + HIDDEN_PAD:QKVR_COLS + 2 * HIDDEN_PAD]  # [x@w3 | 0]
    act = g * pl.reciprocal(1.0 + jnp.exp(-g), approx=True) * u     # silu(g)*u
    ff = jnp.dot(act.astype(bf16), w_out_ref[dim:dim + HIDDEN_PAD, :],
                 preferred_element_type=f32)

    o_ref[...] = h_res + rms_norm(ff, ffn_w)


# --------------------------- per-model preparation ---------------------------
def _rot_matrix(d):
    # interleaved-pair rotation: (x0, x1) -> (-x1, x0), applied via x @ R
    r = np.zeros((d, d), np.float32)
    for i in range(d // 2):
        r[2 * i + 1, 2 * i] = -1.0
        r[2 * i, 2 * i + 1] = 1.0
    return jnp.asarray(r)


def prepare_block_inputs(params, freqs_cos, freqs_sin, batch=BATCH, seq=SEQ):
    """Hoisted, once-per-model fusion of weights and rotary tables."""
    scale = 1.0 / math.sqrt(HEAD_DIM)
    wq_s = params["wq"] * scale
    wqr_s = wq_s @ _rot_matrix(DIM)
    wkr = params["wk"] @ _rot_matrix(KV_DIM)
    pad_qkvr = jnp.zeros((DIM, QKVR_COLS - (2 * DIM + 3 * KV_DIM)), jnp.float32)
    w_qkvr = jnp.concatenate(
        [wq_s, params["wk"], params["wv"], wqr_s, wkr, pad_qkvr], axis=1)     # (64,256)

    pad_h = jnp.zeros((DIM, HIDDEN_PAD - HIDDEN), jnp.float32)
    w13 = jnp.concatenate([params["w1"], pad_h, params["w3"], pad_h], axis=1)  # (64,512)

    w_in = jnp.concatenate([w_qkvr, w13], axis=1).astype(jnp.bfloat16)         # (64,768) bf16

    w2p = jnp.concatenate(
        [params["w2"], jnp.zeros((HIDDEN_PAD - HIDDEN, DIM), jnp.float32)], axis=0)
    w_out = jnp.concatenate([params["wo"], w2p], axis=0).astype(jnp.bfloat16)  # (320,64) bf16

    # cos/sin pre-expanded to the fused [q | k] column layout + norm weights,
    # packed into one small f32 slab (fewer prologue DMAs).
    cos_il = jnp.repeat(freqs_cos, 2, axis=-1)       # (S, head_dim)
    sin_il = jnp.repeat(freqs_sin, 2, axis=-1)
    cos_qk = jnp.concatenate([jnp.tile(cos_il, (1, N_HEADS)),
                              jnp.tile(cos_il, (1, N_KV_HEADS))], axis=1)      # (S, 96)
    sin_qk = jnp.concatenate([jnp.tile(sin_il, (1, N_HEADS)),
                              jnp.tile(sin_il, (1, N_KV_HEADS))], axis=1)
    bs = batch * seq
    misc = jnp.zeros((2, bs + 8, 128), jnp.float32)
    misc = misc.at[0, 0:bs, 0:QK_DIM].set(jnp.tile(cos_qk, (batch, 1)))
    misc = misc.at[1, 0:bs, 0:QK_DIM].set(jnp.tile(sin_qk, (batch, 1)))
    misc = misc.at[0, bs, 0:DIM].set(params["attn_w"].reshape(DIM))
    misc = misc.at[1, bs, 0:DIM].set(params["ffn_w"].reshape(DIM))
    return {"misc": misc, "w_in": w_in, "w_out": w_out}


# ------------------------------- forward -------------------------------------
@jax.jit
def transformer_block(x, misc, w_in, w_out):
    B, S, D = x.shape
    x2 = x.reshape(B * S, D)
    kernel = functools.partial(_block_kernel, B, S, N_HEADS, N_KV_HEADS,
                               HEAD_DIM, NORM_EPS)
    out2 = pl.pallas_call(
        kernel,
        out_shape=jax.ShapeDtypeStruct((B * S, D), jnp.float32),
        grid=(1,),
        in_specs=[
            pl.BlockSpec((B * S, D), lambda i: (0, 0)),          # x (flattened)
            pl.BlockSpec(misc.shape, lambda i: (0, 0, 0)),       # cos/sin + norm w
            pl.BlockSpec(w_in.shape, lambda i: (0, 0)),          # fused qkv+rot+w1+w3
            pl.BlockSpec(w_out.shape, lambda i: (0, 0)),         # wo stacked over w2
        ],
        out_specs=pl.BlockSpec((B * S, D), lambda i: (0, 0)),
        compiler_params=pltpu.CompilerParams(dimension_semantics=("arbitrary",)),
    )(x2, misc, w_in, w_out)
    return out2.reshape(B, S, D)


# --------------------------- pure-JAX reference ------------------------------
def reference_block(x, fcos, fsin, p):
    B, S, D = x.shape
    hd = HEAD_DIM

    def rms(v, w):
        return v * lax.rsqrt(jnp.mean(v * v, -1, keepdims=True) + NORM_EPS) * w[0]

    xq = (x @ p["wq"]).reshape(B, S, N_HEADS, hd)
    xk = (x @ p["wk"]).reshape(B, S, N_KV_HEADS, hd)
    xv = (x @ p["wv"]).reshape(B, S, N_KV_HEADS, hd)

    def rope(t):
        tr, ti = t[..., 0::2], t[..., 1::2]
        c = fcos[None, :, None, :]
        s = fsin[None, :, None, :]
        return jnp.stack([tr * c - ti * s, tr * s + ti * c], -1).reshape(t.shape)

    xq, xk = rope(xq), rope(xk)
    xk = jnp.repeat(xk, N_REP, axis=2)
    xv = jnp.repeat(xv, N_REP, axis=2)
    xq, xk, xv = (t.transpose(0, 2, 1, 3) for t in (xq, xk, xv))
    scores = (xq @ xk.transpose(0, 1, 3, 2)) / math.sqrt(hd)
    mask = jnp.where(jnp.triu(jnp.ones((S, S)), 1) > 0, -jnp.inf, 0.0)
    scores = jax.nn.softmax(scores + mask, axis=-1)
    attn = (scores @ xv).transpose(0, 2, 1, 3).reshape(B, S, D) @ p["wo"]
    h = x + rms(attn, p["attn_w"])
    ff = (jax.nn.silu(x @ p["w1"]) * (x @ p["w3"])) @ p["w2"]
    return h + rms(ff, p["ffn_w"])


# --------------------------------- main --------------------------------------
if __name__ == "__main__":
    key = jax.random.PRNGKey(0)
    ks = jax.random.split(key, 8)

    params = {
        "wq": jax.random.normal(ks[0], (DIM, DIM), jnp.float32) * 0.02,
        "wk": jax.random.normal(ks[1], (DIM, KV_DIM), jnp.float32) * 0.02,
        "wv": jax.random.normal(ks[2], (DIM, KV_DIM), jnp.float32) * 0.02,
        "wo": jax.random.normal(ks[3], (DIM, DIM), jnp.float32) * 0.02,
        "w1": jax.random.normal(ks[4], (DIM, HIDDEN), jnp.float32) * 0.02,
        "w2": jax.random.normal(ks[5], (HIDDEN, DIM), jnp.float32) * 0.02,
        "w3": jax.random.normal(ks[6], (DIM, HIDDEN), jnp.float32) * 0.02,
        "attn_w": jnp.ones((1, DIM), jnp.float32),   # RMSNorm weights init to ones
        "ffn_w": jnp.ones((1, DIM), jnp.float32),
    }

    x = jax.random.normal(ks[7], (BATCH, SEQ, DIM), jnp.float32)

    # llama-style rotary frequencies: (SEQ, HEAD_DIM // 2)
    inv_freq = 1.0 / (10000.0 ** (jnp.arange(0, HEAD_DIM, 2, dtype=jnp.float32) / HEAD_DIM))
    pos = jnp.arange(SEQ, dtype=jnp.float32)
    freqs = jnp.outer(pos, inv_freq)
    freqs_cos, freqs_sin = jnp.cos(freqs), jnp.sin(freqs)

    # once-per-model fused inputs (hoisted out of the forward path)
    fused = prepare_block_inputs(params, freqs_cos, freqs_sin)

    out = transformer_block(x, fused["misc"], fused["w_in"], fused["w_out"])
    out = jax.block_until_ready(out)

    ref = reference_block(x, freqs_cos, freqs_sin, params)
    assert out.shape == (BATCH, SEQ, DIM)
    # bf16 MXU operands (f32 accumulation) vs f32 reference -> relaxed tolerance.
    np.testing.assert_allclose(np.asarray(out), np.asarray(ref), rtol=5e-2, atol=5e-2)

    print("KERNEL_OK")
</pallas_src>

<mosaic_0001>
module attributes {stable_mosaic.version = 11 : i64} {
  func.func @_block_kernel(%arg0: i32, %arg1: memref<32x64xf32, #tpu.memory_space<vmem>>, %arg2: memref<2x40x128xf32, #tpu.memory_space<vmem>>, %arg3: memref<64x768xbf16, #tpu.memory_space<vmem>>, %arg4: memref<320x64xbf16, #tpu.memory_space<vmem>>, %arg5: memref<32x64xf32, #tpu.memory_space<vmem>>) attributes {dimension_semantics = [#tpu.dimension_semantics<arbitrary>], iteration_bounds = array<i64: 1>, scalar_prefetch = 0 : i64, scratch_operands = 0 : i64, tpu.core_type = #tpu.core_type<tc>, window_params = [{pipeline_mode = #tpu.pipeline_mode<synchronous>, transform_indices = @transform_0, window_bounds = array<i64: 32, 64>}, {pipeline_mode = #tpu.pipeline_mode<synchronous>, transform_indices = @transform_1, window_bounds = array<i64: 2, 40, 128>}, {pipeline_mode = #tpu.pipeline_mode<synchronous>, transform_indices = @transform_2, window_bounds = array<i64: 64, 768>}, {pipeline_mode = #tpu.pipeline_mode<synchronous>, transform_indices = @transform_3, window_bounds = array<i64: 320, 64>}, {pipeline_mode = #tpu.pipeline_mode<synchronous>, transform_indices = @transform_4, window_bounds = array<i64: 32, 64>}]} {
    %c0 = arith.constant 0 : index
    %c0_0 = arith.constant 0 : index
    %0 = vector.load %arg1[%c0, %c0_0] : memref<32x64xf32, #tpu.memory_space<vmem>>, vector<32x64xf32>
    %c0_1 = arith.constant 0 : index
    %c0_2 = arith.constant 0 : index
    %c0_3 = arith.constant 0 : index
    %1 = vector.load %arg2[%c0_1, %c0_2, %c0_3] : memref<2x40x128xf32, #tpu.memory_space<vmem>>, vector<1x40x128xf32>
    %2 = vector.shape_cast %1 : vector<1x40x128xf32> to vector<40x128xf32>
    %c1 = arith.constant 1 : index
    %c0_4 = arith.constant 0 : index
    %c0_5 = arith.constant 0 : index
    %3 = vector.load %arg2[%c1, %c0_4, %c0_5] : memref<2x40x128xf32, #tpu.memory_space<vmem>>, vector<1x40x128xf32>
    %4 = vector.shape_cast %3 : vector<1x40x128xf32> to vector<40x128xf32>
    %5 = vector.extract_strided_slice %2 {offsets = [0, 0], sizes = [32, 96], strides = [1, 1]} : vector<40x128xf32> to vector<32x96xf32>
    %6 = vector.extract_strided_slice %4 {offsets = [0, 0], sizes = [32, 96], strides = [1, 1]} : vector<40x128xf32> to vector<32x96xf32>
    %7 = vector.extract_strided_slice %2 {offsets = [32, 0], sizes = [1, 64], strides = [1, 1]} : vector<40x128xf32> to vector<1x64xf32>
    %8 = vector.extract_strided_slice %4 {offsets = [32, 0], sizes = [1, 64], strides = [1, 1]} : vector<40x128xf32> to vector<1x64xf32>
    %9 = arith.truncf %0 : vector<32x64xf32> to vector<32x64xbf16>
    %c0_6 = arith.constant 0 : index
    %c0_7 = arith.constant 0 : index
    %10 = vector.load %arg3[%c0_6, %c0_7] : memref<64x768xbf16, #tpu.memory_space<vmem>>, vector<64x768xbf16>
    %cst = arith.constant dense<0.000000e+00> : vector<32x768xf32>
    %11 = tpu.matmul %9, %10, %cst {dimension_numbers = #tpu.dot_dimension_numbers<[1], [0], [0], [1], [0, 0, 1, 1], [], []>} : vector<32x64xbf16>, vector<64x768xbf16>, vector<32x768xf32> -> vector<32x768xf32>
    %12 = vector.extract_strided_slice %11 {offsets = [0, 0], sizes = [32, 96], strides = [1, 1]} : vector<32x768xf32> to vector<32x96xf32>
    %13 = vector.extract_strided_slice %11 {offsets = [0, 96], sizes = [32, 32], strides = [1, 1]} : vector<32x768xf32> to vector<32x32xf32>
    %14 = vector.extract_strided_slice %11 {offsets = [0, 128], sizes = [32, 96], strides = [1, 1]} : vector<32x768xf32> to vector<32x96xf32>
    %15 = arith.mulf %12, %5 : vector<32x96xf32>
    %16 = arith.mulf %14, %6 : vector<32x96xf32>
    %17 = arith.addf %15, %16 : vector<32x96xf32>
    %18 = vector.extract_strided_slice %17 {offsets = [0, 0], sizes = [32, 64], strides = [1, 1]} : vector<32x96xf32> to vector<32x64xf32>
    %19 = vector.extract_strided_slice %17 {offsets = [0, 64], sizes = [32, 32], strides = [1, 1]} : vector<32x96xf32> to vector<32x32xf32>
    %20 = vector.extract_strided_slice %18 {offsets = [0, 0], sizes = [32, 16], strides = [1, 1]} : vector<32x64xf32> to vector<32x16xf32>
    %21 = vector.extract_strided_slice %18 {offsets = [0, 16], sizes = [32, 16], strides = [1, 1]} : vector<32x64xf32> to vector<32x16xf32>
    %22 = vector.extract_strided_slice %18 {offsets = [0, 32], sizes = [32, 16], strides = [1, 1]} : vector<32x64xf32> to vector<32x16xf32>
    %23 = vector.extract_strided_slice %18 {offsets = [0, 48], sizes = [32, 16], strides = [1, 1]} : vector<32x64xf32> to vector<32x16xf32>
    %24 = tpu.concatenate %20, %21, %22, %23 in 0 : vector<32x16xf32>, vector<32x16xf32>, vector<32x16xf32>, vector<32x16xf32> -> vector<128x16xf32>
    %25 = vector.extract_strided_slice %19 {offsets = [0, 0], sizes = [32, 16], strides = [1, 1]} : vector<32x32xf32> to vector<32x16xf32>
    %26 = vector.extract_strided_slice %19 {offsets = [0, 0], sizes = [32, 16], strides = [1, 1]} : vector<32x32xf32> to vector<32x16xf32>
    %27 = vector.extract_strided_slice %19 {offsets = [0, 16], sizes = [32, 16], strides = [1, 1]} : vector<32x32xf32> to vector<32x16xf32>
    %28 = vector.extract_strided_slice %19 {offsets = [0, 16], sizes = [32, 16], strides = [1, 1]} : vector<32x32xf32> to vector<32x16xf32>
    %29 = tpu.concatenate %25, %26, %27, %28 in 0 : vector<32x16xf32>, vector<32x16xf32>, vector<32x16xf32>, vector<32x16xf32> -> vector<128x16xf32>
    %30 = vector.extract_strided_slice %13 {offsets = [0, 0], sizes = [32, 16], strides = [1, 1]} : vector<32x32xf32> to vector<32x16xf32>
    %31 = vector.extract_strided_slice %13 {offsets = [0, 0], sizes = [32, 16], strides = [1, 1]} : vector<32x32xf32> to vector<32x16xf32>
    %32 = vector.extract_strided_slice %13 {offsets = [0, 16], sizes = [32, 16], strides = [1, 1]} : vector<32x32xf32> to vector<32x16xf32>
    %33 = vector.extract_strided_slice %13 {offsets = [0, 16], sizes = [32, 16], strides = [1, 1]} : vector<32x32xf32> to vector<32x16xf32>
    %34 = tpu.concatenate %30, %31, %32, %33 in 0 : vector<32x16xf32>, vector<32x16xf32>, vector<32x16xf32>, vector<32x16xf32> -> vector<128x16xf32>
    %35 = vector.shape_cast %24 : vector<128x16xf32> to vector<8x16x16xf32>
    %36 = arith.truncf %35 : vector<8x16x16xf32> to vector<8x16x16xbf16>
    %37 = vector.shape_cast %29 : vector<128x16xf32> to vector<8x16x16xf32>
    %38 = arith.truncf %37 : vector<8x16x16xf32> to vector<8x16x16xbf16>
    %39 = vector.shape_cast %34 : vector<128x16xf32> to vector<8x16x16xf32>
    %40 = arith.truncf %39 : vector<8x16x16xf32> to vector<8x16x16xbf16>
    "tpu.trace_start"() <{level = 10 : i32, message = "gqd,gkd->gqk"}> : () -> ()
    %cst_8 = arith.constant dense<0.000000e+00> : vector<8x16x16xf32>
    %41 = tpu.matmul %36, %38, %cst_8 {dimension_numbers = #tpu.dot_dimension_numbers<[2], [2], [1], [1], [0, 0, 0, 1, 1, 1], [0], [0]>} : vector<8x16x16xbf16>, vector<8x16x16xbf16>, vector<8x16x16xf32> -> vector<8x16x16xf32>
    "tpu.trace_stop"() : () -> ()
    %42 = tpu.iota {dimensions = array<i32: 1>} : vector<8x16x16xi32>
    %43 = tpu.iota {dimensions = array<i32: 2>} : vector<8x16x16xi32>
    %44 = arith.cmpi sle, %43, %42 : vector<8x16x16xi32>
    %cst_9 = arith.constant -1.000000e+30 : f32
    %45 = vector.broadcast %cst_9 : f32 to vector<8x16x16xf32>
    %46 = arith.select %44, %41, %45 : vector<8x16x16xi1>, vector<8x16x16xf32>
    %cst_10 = arith.constant dense<0xFF800000> : vector<8x16xf32>
    %47 = vector.multi_reduction <maximumf>, %46, %cst_10 [2] : vector<8x16x16xf32> to vector<8x16xf32>
    %48 = vector.shape_cast %47 : vector<8x16xf32> to vector<8x16x1xf32>
    %49 = vector.broadcast %48 : vector<8x16x1xf32> to vector<8x16x16xf32>
    %50 = arith.subf %46, %49 : vector<8x16x16xf32>
    %51 = math.exp %50 : vector<8x16x16xf32>
    %cst_11 = arith.constant dense<0.000000e+00> : vector<8x16xf32>
    %52 = vector.multi_reduction <add>, %51, %cst_11 [2] : vector<8x16x16xf32> to vector<8x16xf32>
    %53 = vector.shape_cast %52 : vector<8x16xf32> to vector<8x16x1xf32>
    %54 = tpu.reciprocal %53 {approx = true} : vector<8x16x1xf32> -> vector<8x16x1xf32>
    %55 = vector.broadcast %54 : vector<8x16x1xf32> to vector<8x16x16xf32>
    %56 = arith.mulf %51, %55 : vector<8x16x16xf32>
    %57 = arith.truncf %56 : vector<8x16x16xf32> to vector<8x16x16xbf16>
    "tpu.trace_start"() <{level = 10 : i32, message = "gqk,gkd->gqd"}> : () -> ()
    %cst_12 = arith.constant dense<0.000000e+00> : vector<8x16x16xf32>
    %58 = tpu.matmul %57, %40, %cst_12 {dimension_numbers = #tpu.dot_dimension_numbers<[2], [1], [1], [2], [0, 0, 0, 1, 1, 2], [0], [0]>} : vector<8x16x16xbf16>, vector<8x16x16xbf16>, vector<8x16x16xf32> -> vector<8x16x16xf32>
    "tpu.trace_stop"() : () -> ()
    %59 = vector.shape_cast %58 : vector<8x16x16xf32> to vector<128x16xf32>
    %60 = vector.extract_strided_slice %59 {offsets = [0, 0], sizes = [32, 16], strides = [1, 1]} : vector<128x16xf32> to vector<32x16xf32>
    %61 = vector.extract_strided_slice %59 {offsets = [32, 0], sizes = [32, 16], strides = [1, 1]} : vector<128x16xf32> to vector<32x16xf32>
    %62 = vector.extract_strided_slice %59 {offsets = [64, 0], sizes = [32, 16], strides = [1, 1]} : vector<128x16xf32> to vector<32x16xf32>
    %63 = vector.extract_strided_slice %59 {offsets = [96, 0], sizes = [32, 16], strides = [1, 1]} : vector<128x16xf32> to vector<32x16xf32>
    %64 = tpu.concatenate %60, %61, %62, %63 in 1 : vector<32x16xf32>, vector<32x16xf32>, vector<32x16xf32>, vector<32x16xf32> -> vector<32x64xf32>
    %65 = arith.truncf %64 : vector<32x64xf32> to vector<32x64xbf16>
    %c0_13 = arith.constant 0 : index
    %c0_14 = arith.constant 0 : index
    %66 = vector.load %arg4[%c0_13, %c0_14] : memref<320x64xbf16, #tpu.memory_space<vmem>>, vector<64x64xbf16>
    %cst_15 = arith.constant dense<0.000000e+00> : vector<32x64xf32>
    %67 = tpu.matmul %65, %66, %cst_15 {dimension_numbers = #tpu.dot_dimension_numbers<[1], [0], [0], [1], [0, 0, 1, 1], [], []>} : vector<32x64xbf16>, vector<64x64xbf16>, vector<32x64xf32> -> vector<32x64xf32>
    %68 = arith.mulf %67, %67 : vector<32x64xf32>
    %cst_16 = arith.constant dense<0.000000e+00> : vector<32xf32>
    %69 = vector.multi_reduction <add>, %68, %cst_16 [1] : vector<32x64xf32> to vector<32xf32>
    %70 = vector.shape_cast %69 : vector<32xf32> to vector<32x1xf32>
    %cst_17 = arith.constant 6.400000e+01 : f32
    %71 = vector.broadcast %cst_17 : f32 to vector<32x1xf32>
    %72 = arith.divf %70, %71 : vector<32x1xf32>
    %cst_18 = arith.constant 9.99999974E-6 : f32
    %73 = vector.broadcast %cst_18 : f32 to vector<32x1xf32>
    %74 = arith.addf %72, %73 : vector<32x1xf32>
    %75 = math.rsqrt %74 : vector<32x1xf32>
    %76 = vector.broadcast %75 : vector<32x1xf32> to vector<32x64xf32>
    %77 = arith.mulf %67, %76 : vector<32x64xf32>
    %78 = vector.broadcast %7 : vector<1x64xf32> to vector<32x64xf32>
    %79 = arith.mulf %77, %78 : vector<32x64xf32>
    %80 = arith.addf %0, %79 : vector<32x64xf32>
    %81 = vector.extract_strided_slice %11 {offsets = [0, 256], sizes = [32, 256], strides = [1, 1]} : vector<32x768xf32> to vector<32x256xf32>
    %82 = vector.extract_strided_slice %11 {offsets = [0, 512], sizes = [32, 256], strides = [1, 1]} : vector<32x768xf32> to vector<32x256xf32>
    %cst_19 = arith.constant 0.000000e+00 : f32
    %83 = vector.broadcast %cst_19 : f32 to vector<32x256xf32>
    %84 = arith.subf %83, %81 : vector<32x256xf32>
    %85 = math.exp %84 : vector<32x256xf32>
    %cst_20 = arith.constant 1.000000e+00 : f32
    %86 = vector.broadcast %cst_20 : f32 to vector<32x256xf32>
    %87 = arith.addf %86, %85 : vector<32x256xf32>
    %88 = tpu.reciprocal %87 {approx = true} : vector<32x256xf32> -> vector<32x256xf32>
    %89 = arith.mulf %81, %88 : vector<32x256xf32>
    %90 = arith.mulf %89, %82 : vector<32x256xf32>
    %91 = arith.truncf %90 : vector<32x256xf32> to vector<32x256xbf16>
    %c64 = arith.constant 64 : index
    %c0_21 = arith.constant 0 : index
    %92 = vector.load %arg4[%c64, %c0_21] : memref<320x64xbf16, #tpu.memory_space<vmem>>, vector<256x64xbf16>
    %cst_22 = arith.constant dense<0.000000e+00> : vector<32x64xf32>
    %93 = tpu.matmul %91, %92, %cst_22 {dimension_numbers = #tpu.dot_dimension_numbers<[1], [0], [0], [1], [0, 0, 1, 1], [], []>} : vector<32x256xbf16>, vector<256x64xbf16>, vector<32x64xf32> -> vector<32x64xf32>
    %94 = arith.mulf %93, %93 : vector<32x64xf32>
    %cst_23 = arith.constant dense<0.000000e+00> : vector<32xf32>
    %95 = vector.multi_reduction <add>, %94, %cst_23 [1] : vector<32x64xf32> to vector<32xf32>
    %96 = vector.shape_cast %95 : vector<32xf32> to vector<32x1xf32>
    %cst_24 = arith.constant 6.400000e+01 : f32
    %97 = vector.broadcast %cst_24 : f32 to vector<32x1xf32>
    %98 = arith.divf %96, %97 : vector<32x1xf32>
    %cst_25 = arith.constant 9.99999974E-6 : f32
    %99 = vector.broadcast %cst_25 : f32 to vector<32x1xf32>
    %100 = arith.addf %98, %99 : vector<32x1xf32>
    %101 = math.rsqrt %100 : vector<32x1xf32>
    %102 = vector.broadcast %101 : vector<32x1xf32> to vector<32x64xf32>
    %103 = arith.mulf %93, %102 : vector<32x64xf32>
    %104 = vector.broadcast %8 : vector<1x64xf32> to vector<32x64xf32>
    %105 = arith.mulf %103, %104 : vector<32x64xf32>
    %106 = arith.addf %80, %105 : vector<32x64xf32>
    %c0_26 = arith.constant 0 : index
    %c0_27 = arith.constant 0 : index
    %107 = vector.load %arg5[%c0_26, %c0_27] : memref<32x64xf32, #tpu.memory_space<vmem>>, vector<32x64xf32>
    tpu.vector_store %arg5[%c0_26, %c0_27], %106 {strides = array<i32>} : memref<32x64xf32, #tpu.memory_space<vmem>>, vector<32x64xf32>,
    return
  }
  func.func @transform_0(%arg0: i32) -> (i32, i32) {
    %c0_i32 = arith.constant 0 : i32
    %c0_i32_0 = arith.constant 0 : i32
    %c0_i32_1 = arith.constant 0 : i32
    return %c0_i32, %c0_i32_0 : i32, i32
  }
  func.func @transform_1(%arg0: i32) -> (i32, i32, i32) {
    %c0_i32 = arith.constant 0 : i32
    %c0_i32_0 = arith.constant 0 : i32
    %c0_i32_1 = arith.constant 0 : i32
    %c0_i32_2 = arith.constant 0 : i32
    return %c0_i32, %c0_i32_0, %c0_i32_1 : i32, i32, i32
  }
  func.func @transform_2(%arg0: i32) -> (i32, i32) {
    %c0_i32 = arith.constant 0 : i32
    %c0_i32_0 = arith.constant 0 : i32
    %c0_i32_1 = arith.constant 0 : i32
    return %c0_i32, %c0_i32_0 : i32, i32
  }
  func.func @transform_3(%arg0: i32) -> (i32, i32) {
    %c0_i32 = arith.constant 0 : i32
    %c0_i32_0 = arith.constant 0 : i32
    %c0_i32_1 = arith.constant 0 : i32
    return %c0_i32, %c0_i32_0 : i32, i32
  }
  func.func @transform_4(%arg0: i32) -> (i32, i32) {
    %c0_i32 = arith.constant 0 : i32
    %c0_i32_0 = arith.constant 0 : i32
    %c0_i32_1 = arith.constant 0 : i32
    return %c0_i32, %c0_i32_0 : i32, i32
  }
}

</mosaic_0001>

<llo_original>
// kernel: transformer_block.1
$region0: #{transformer_block.1}
  #allocation0 [shape = 'u32[]', space=smem, size = 0x4, offset = 0x4, fixed_abs, tag = 'smem constant byte address 0x4 - core index']
  #allocation1 [shape = 'u32[144,128]{1,0:T(1,128)}', space=vmem, size = 0x12000, scoped, tag = 'internal scratch']
  %s0 = inlined_call_operand.vmem [shape: f32[32,64], index: 0, kind: input, shape index: {}]
  %s1 = inlined_call_operand.hbm [shape: f32[2,40,128], index: 1, kind: input, shape index: {}]
  %s2 = inlined_call_operand.vmem [shape: bf16[64,768], index: 2, kind: input, shape index: {}]
  %s3 = inlined_call_operand.vmem [shape: bf16[320,64], index: 3, kind: input, shape index: {}]
  %s4 = inlined_call_operand.hbm [shape: f32[32,64], index: 4, kind: output, shape index: {}]
  %s5 = sld [smem:[#allocation0]]
  $region30: #{transformer_block.1} parent=0
    _
  %s7 = ssub.s32 1, %s5
  %s8 = scalar_select 0, %s7, %s5
  $region1: #{transformer_block.1} parent=0
    #allocation2 [shape = 'u8[40960]{0}', space=vmem, size = 0xa000, scoped, tag = 'input window, operand 1, single buffered']
    #allocation3 [shape = 's32[1]{0}', space=sflag, size = 0x4, scoped, tag = 'scoped memory for transformer_block.1']
    #allocation4 [shape = 's32[1]{0}', space=sflag, size = 0x4, scoped, tag = 'scoped memory for transformer_block.1']
    #allocation5 [shape = 'u8[16384]{0}', space=vmem, size = 0x4000, scoped, tag = 'output window, operand 0, single buffered']
    %9 = vsyncpa [#allocation3], 0
    %10 = vsyncpa [#allocation4], 0
    // Predicated region
    $region2: #{transformer_block.1} parent=1 // pred_check
      _
    $region3: #{transformer_block.1} parent=1 // pred_check_branch
      %12 = sbr.rel (0) target = $region5
    $region4: #{transformer_block.1} parent=1 // pred_region
      _
    $region5: #{transformer_block.1} parent=1 // pred_fallthru
      _
    // Predicated region
    $region6: #{transformer_block.1} parent=1 // pred_check
      _
    $region7: #{transformer_block.1} parent=1 // pred_check_branch
      %14 = sbr.rel (0) target = $region9
    $region8: #{transformer_block.1} parent=1 // pred_region
      %s16 = ssub.s32 1280, 1280
      %17 = vsyncadd [#allocation3], %s16
      %s18 = sshll.u32 [#allocation2], 4
      %s19 = int_to_ptr.vmem [resolvable:$true] %s18
      %24 = dma.hbm_to_vmem [thread:$0]  %s1, 1280, %s19, [#allocation3], 128, 128, 8
    $region9: #{transformer_block.1} parent=1 // pred_fallthru
      _
    // Predicated region
    $region10: #{transformer_block.1} parent=1 // pred_check
      _
    $region11: #{transformer_block.1} parent=1 // pred_check_branch
      %26 = sbr.rel (0) target = $region13
    $region12: #{transformer_block.1} parent=1 // pred_region
      _
    $region13: #{transformer_block.1} parent=1 // pred_fallthru
      _
    // Predicated region
    $region14: #{transformer_block.1} parent=1 // pred_check
      _
    $region15: #{transformer_block.1} parent=1 // pred_check_branch
      %28 = sbr.rel (0) target = $region17
    $region16: #{transformer_block.1} parent=1 // pred_region
      _
    $region17: #{transformer_block.1} parent=1 // pred_fallthru
      _
    // Predicated region
    $region18: #{transformer_block.1} parent=1 // pred_check
      _
    $region19: #{transformer_block.1} parent=1 // pred_check_branch
      %30 = sbr.rel (0) target = $region21
    $region20: #{transformer_block.1} parent=1 // pred_region
      %31 = dma.done [#allocation3], 1280
    $region21: #{transformer_block.1} parent=1 // pred_fallthru
      _
    %v33 = vld [vmem:[%s0] sm:$0xff]
    %v34 = vld [vmem:[%s0 + $0x8] sm:$0xff]
    %v35 = vld [vmem:[%s0 + $0x10] sm:$0xff]
    %v36 = vld [vmem:[%s0 + $0x18] sm:$0xff]
    %v37 = vld [vmem:[#allocation2] sm:$0xff]
    %v38 = vld [vmem:[#allocation2 + $0x8] sm:$0xff]
    %v39 = vld [vmem:[#allocation2 + $0x10] sm:$0xff]
    %v40 = vld [vmem:[#allocation2 + $0x18] sm:$0xff]
    %v41 = vld [vmem:[#allocation2 + $0x20] sm:$0xff]
    %s42 = scalar_lea.vmem [#allocation2], 40
    %v43 = vld [vmem:[%s42] sm:$0xff]
    %v44 = vld [vmem:[%s42 + $0x8] sm:$0xff]
    %v45 = vld [vmem:[%s42 + $0x10] sm:$0xff]
    %v46 = vld [vmem:[%s42 + $0x18] sm:$0xff]
    %v47 = vld [vmem:[%s42 + $0x20] sm:$0xff]
    %v48 = vpack.c.bf16 %v34, %v33
    %v49 = vpack.c.bf16 %v36, %v35
    %v50 = vld [vmem:[%s2] sm:$0xff]
    %v51 = vld [vmem:[%s2 + $0x8] sm:$0xff]
    %v52 = vld [vmem:[%s2 + $0x10] sm:$0xff]
    %v53 = vld [vmem:[%s2 + $0x18] sm:$0xff]
    %v54 = vld [vmem:[%s2 + $0x20] sm:$0xff]
    %v55 = vld [vmem:[%s2 + $0x28] sm:$0xff]
    %v56 = vld [vmem:[%s2 + $0x30] sm:$0xff]
    %v57 = vld [vmem:[%s2 + $0x38] sm:$0xff]
    %v58 = vld [vmem:[%s2 + $0x40] sm:$0xff]
    %v59 = vld [vmem:[%s2 + $0x48] sm:$0xff]
    %v60 = vld [vmem:[%s2 + $0x50] sm:$0xff]
    %v61 = vld [vmem:[%s2 + $0x58] sm:$0xff]
    %v62 = vld [vmem:[%s2 + $0x60] sm:$0xff]
    %v63 = vld [vmem:[%s2 + $0x68] sm:$0xff]
    %v64 = vld [vmem:[%s2 + $0x70] sm:$0xff]
    %v65 = vld [vmem:[%s2 + $0x78] sm:$0xff]
    %v66 = vld [vmem:[%s2 + $0x80] sm:$0xff]
    %v67 = vld [vmem:[%s2 + $0x88] sm:$0xff]
    %v68 = vld [vmem:[%s2 + $0x90] sm:$0xff]
    %v69 = vld [vmem:[%s2 + $0x98] sm:$0xff]
    %v70 = vld [vmem:[%s2 + $0xa0] sm:$0xff]
    %v71 = vld [vmem:[%s2 + $0xa8] sm:$0xff]
    %v72 = vld [vmem:[%s2 + $0xb0] sm:$0xff]
    %v73 = vld [vmem:[%s2 + $0xb8] sm:$0xff]
    %v98 = vunpack.c.l.b16 %v50
    %v99 = vunpack.c.h.b16 %v50
    %v100 = vunpack.c.l.b16 %v51
    %v101 = vunpack.c.h.b16 %v51
    %v102 = vunpack.c.l.b16 %v52
    %v103 = vunpack.c.h.b16 %v52
    %v104 = vunpack.c.l.b16 %v53
    %v105 = vunpack.c.h.b16 %v53
    %v106 = vunpack.c.l.b16 %v54
    %v107 = vunpack.c.h.b16 %v54
    %v108 = vunpack.c.l.b16 %v55
    %v109 = vunpack.c.h.b16 %v55
    %v110 = vunpack.c.l.b16 %v56
    %v111 = vunpack.c.h.b16 %v56
    %v112 = vunpack.c.l.b16 %v57
    %v113 = vunpack.c.h.b16 %v57
    %v114 = vunpack.c.l.b16 %v58
    %v115 = vunpack.c.h.b16 %v58
    %v116 = vunpack.c.l.b16 %v59
    %v117 = vunpack.c.h.b16 %v59
    %v118 = vunpack.c.l.b16 %v60
    %v119 = vunpack.c.h.b16 %v60
    %v120 = vunpack.c.l.b16 %v61
    %v121 = vunpack.c.h.b16 %v61
    %v122 = vunpack.c.l.b16 %v62
    %v123 = vunpack.c.h.b16 %v62
    %v124 = vunpack.c.l.b16 %v63
    %v125 = vunpack.c.h.b16 %v63
    %v126 = vunpack.c.l.b16 %v64
    %v127 = vunpack.c.h.b16 %v64
    %v128 = vunpack.c.l.b16 %v65
    %v129 = vunpack.c.h.b16 %v65
    %v130 = vunpack.c.l.b16 %v66
    %v131 = vunpack.c.h.b16 %v66
    %v132 = vunpack.c.l.b16 %v67
    %v133 = vunpack.c.h.b16 %v67
    %v134 = vunpack.c.l.b16 %v68
    %v135 = vunpack.c.h.b16 %v68
    %v136 = vunpack.c.l.b16 %v69
    %v137 = vunpack.c.h.b16 %v69
    %v138 = vunpack.c.l.b16 %v70
    %v139 = vunpack.c.h.b16 %v70
    %v140 = vunpack.c.l.b16 %v71
    %v141 = vunpack.c.h.b16 %v71
    %v142 = vunpack.c.l.b16 %v72
    %v143 = vunpack.c.h.b16 %v72
    %v144 = vunpack.c.l.b16 %v73
    %v145 = vunpack.c.h.b16 %v73
    %v146 = vpack.c.b16 %v104, %v98
    %v147 = vpack.c.b16 %v105, %v99
    %v148 = vpack.c.b16 %v106, %v100
    %v149 = vpack.c.b16 %v107, %v101
    %v150 = vpack.c.b16 %v108, %v102
    %v151 = vpack.c.b16 %v109, %v103
    %v152 = vpack.c.b16 %v116, %v110
    %v153 = vpack.c.b16 %v117, %v111
    %v154 = vpack.c.b16 %v118, %v112
    %v155 = vpack.c.b16 %v119, %v113
    %v156 = vpack.c.b16 %v120, %v114
    %v157 = vpack.c.b16 %v121, %v115
    %v158 = vpack.c.b16 %v128, %v122
    %v159 = vpack.c.b16 %v129, %v123
    %v160 = vpack.c.b16 %v130, %v124
    %v161 = vpack.c.b16 %v131, %v125
    %v162 = vpack.c.b16 %v132, %v126
    %v163 = vpack.c.b16 %v133, %v127
    %v164 = vpack.c.b16 %v140, %v134
    %v165 = vpack.c.b16 %v141, %v135
    %v166 = vpack.c.b16 %v142, %v136
    %v167 = vpack.c.b16 %v143, %v137
    %v168 = vpack.c.b16 %v144, %v138
    %v169 = vpack.c.b16 %v145, %v139
    %vm194 = vcmask 523264
    %v196 = vsel %vm194, %v48, 0
    %v199 = vsel %vm194, %v49, 0
    %201 = vmatprep.subr.bf16.mxu0 0
    %202 = vmatpush1.bf16.msra.mxu0 0
    %203 = vmatprep.subr.bf16.mxu0 0
    %204 = vmatpush1.bf16.msra.mxu0 0
    %205 = vmatprep.subr.bf16.mxu0 0
    %206 = vmatpush1.bf16.msra.mxu0 0
    %207 = vmatprep.subr.bf16.mxu0 0
    %208 = vmatpush1.bf16.msra.mxu0 0
    %209 = vmatprep.subr.bf16.mxu0 %v165
    %210 = vmatpush1.bf16.msra.mxu0 %v164
    %211 = vmatprep.subr.bf16.mxu0 %v159
    %212 = vmatpush1.bf16.msra.mxu0 %v158
    %213 = vmatprep.subr.bf16.mxu0 %v153
    %214 = vmatpush1.bf16.msra.mxu0 %v152
    %215 = vmatprep.subr.bf16.mxu0 %v147
    %216 = vmatpush1.bf16.msra.mxu0 %v146
    %217 = vmatprep.subr.bf16.mxu0 0
    %218 = vmatpush2.bf16.msra.mxu0 0
    %219 = vmatprep.subr.bf16.mxu0 0
    %220 = vmatpush2.bf16.msra.mxu0 0
    %221 = vmatprep.subr.bf16.mxu0 0
    %222 = vmatpush2.bf16.msra.mxu0 0
    %223 = vmatprep.subr.bf16.mxu0 0
    %224 = vmatpush2.bf16.msra.mxu0 0
    %225 = vmatprep.subr.bf16.mxu0 0
    %226 = vmatpush2.bf16.msra.mxu0 0
    %227 = vmatprep.subr.bf16.mxu0 0
    %228 = vmatpush2.bf16.msra.mxu0 0
    %229 = vmatprep.subr.bf16.mxu0 0
    %230 = vmatpush2.bf16.msra.mxu0 0
    %231 = vmatprep.subr.bf16.mxu0 0
    %232 = vmatpush2.bf16.msra.mxu0 0
    %233 = vmatprep.mubr.bf16.mxu0 0
    %234 = vmatmul.mubr.bf16.gmra.mxu0 %v196
    %v235 = vpop.f32.mrf.mxu0
    %v236 = vadd.f32 0.0, %v235
    %v237 = vpop.f32.mrf.mxu0
    %v238 = vadd.f32 0.0, %v237
    %v239 = vpop.f32.mrf.mxu0
    %v240 = vadd.f32 0.0, %v239
    %v241 = vpop.f32.mrf.mxu0
    %v242 = vadd.f32 0.0, %v241
    %243 = vmatprep.mubr.bf16.mxu0 0
    %244 = vmatmul.mubr.bf16.gmra.mxu0 %v199
    %v245 = vpop.f32.mrf.mxu0
    %v246 = vadd.f32 0.0, %v245
    %v247 = vpop.f32.mrf.mxu0
    %v248 = vadd.f32 0.0, %v247
    %v249 = vpop.f32.mrf.mxu0
    %v250 = vadd.f32 0.0, %v249
    %v251 = vpop.f32.mrf.mxu0
    %v252 = vadd.f32 0.0, %v251
    %253 = vdwg.mxu0
    %254 = vmatprep.subr.bf16.mxu0 0
    %255 = vmatpush1.bf16.msra.mxu0 0
    %256 = vmatprep.subr.bf16.mxu0 0
    %257 = vmatpush1.bf16.msra.mxu0 0
    %258 = vmatprep.subr.bf16.mxu0 0
    %259 = vmatpush1.bf16.msra.mxu0 0
    %260 = vmatprep.subr.bf16.mxu0 0
    %261 = vmatpush1.bf16.msra.mxu0 0
    %262 = vmatprep.subr.bf16.mxu0 %v167
    %263 = vmatpush1.bf16.msra.mxu0 %v166
    %264 = vmatprep.subr.bf16.mxu0 %v161
    %265 = vmatpush1.bf16.msra.mxu0 %v160
    %266 = vmatprep.subr.bf16.mxu0 %v155
    %267 = vmatpush1.bf16.msra.mxu0 %v154
    %268 = vmatprep.subr.bf16.mxu0 %v149
    %269 = vmatpush1.bf16.msra.mxu0 %v148
    %270 = vmatprep.subr.bf16.mxu0 0
    %271 = vmatpush2.bf16.msra.mxu0 0
    %272 = vmatprep.subr.bf16.mxu0 0
    %273 = vmatpush2.bf16.msra.mxu0 0
    %274 = vmatprep.subr.bf16.mxu0 0
    %275 = vmatpush2.bf16.msra.mxu0 0
    %276 = vmatprep.subr.bf16.mxu0 0
    %277 = vmatpush2.bf16.msra.mxu0 0
    %278 = vmatprep.subr.bf16.mxu0 0
    %279 = vmatpush2.bf16.msra.mxu0 0
    %280 = vmatprep.subr.bf16.mxu0 0
    %281 = vmatpush2.bf16.msra.mxu0 0
    %282 = vmatprep.subr.bf16.mxu0 0
    %283 = vmatpush2.bf16.msra.mxu0 0
    %284 = vmatprep.subr.bf16.mxu0 0
    %285 = vmatpush2.bf16.msra.mxu0 0
    %286 = vmatprep.mubr.bf16.mxu0 0
    %287 = vmatmul.mubr.bf16.gmra.mxu0 %v196
    %v288 = vpop.f32.mrf.mxu0
    %v289 = vadd.f32 0.0, %v288
    %v290 = vpop.f32.mrf.mxu0
    %v291 = vadd.f32 0.0, %v290
    %v292 = vpop.f32.mrf.mxu0
    %v293 = vadd.f32 0.0, %v292
    %v294 = vpop.f32.mrf.mxu0
    %v295 = vadd.f32 0.0, %v294
    %296 = vmatprep.mubr.bf16.mxu0 0
    %297 = vmatmul.mubr.bf16.gmra.mxu0 %v199
    %v298 = vpop.f32.mrf.mxu0
    %v299 = vadd.f32 0.0, %v298
    %v300 = vpop.f32.mrf.mxu0
    %v301 = vadd.f32 0.0, %v300
    %v302 = vpop.f32.mrf.mxu0
    %v303 = vadd.f32 0.0, %v302
    %v304 = vpop.f32.mrf.mxu0
    %v305 = vadd.f32 0.0, %v304
    %306 = vdwg.mxu0
    %307 = vmatprep.subr.bf16.mxu0 0
    %308 = vmatpush1.bf16.msra.mxu0 0
    %309 = vmatprep.subr.bf16.mxu0 0
    %310 = vmatpush1.bf16.msra.mxu0 0
    %311 = vmatprep.subr.bf16.mxu0 0
    %312 = vmatpush1.bf16.msra.mxu0 0
    %313 = vmatprep.subr.bf16.mxu0 0
    %314 = vmatpush1.bf16.msra.mxu0 0
    %315 = vmatprep.subr.bf16.mxu0 %v169
    %316 = vmatpush1.bf16.msra.mxu0 %v168
    %317 = vmatprep.subr.bf16.mxu0 %v163
    %318 = vmatpush1.bf16.msra.mxu0 %v162
    %319 = vmatprep.subr.bf16.mxu0 %v157
    %320 = vmatpush1.bf16.msra.mxu0 %v156
    %321 = vmatprep.subr.bf16.mxu0 %v151
    %322 = vmatpush1.bf16.msra.mxu0 %v150
    %323 = vmatprep.subr.bf16.mxu0 0
    %324 = vmatpush2.bf16.msra.mxu0 0
    %325 = vmatprep.subr.bf16.mxu0 0
    %326 = vmatpush2.bf16.msra.mxu0 0
    %327 = vmatprep.subr.bf16.mxu0 0
    %328 = vmatpush2.bf16.msra.mxu0 0
    %329 = vmatprep.subr.bf16.mxu0 0
    %330 = vmatpush2.bf16.msra.mxu0 0
    %331 = vmatprep.subr.bf16.mxu0 0
    %332 = vmatpush2.bf16.msra.mxu0 0
    %333 = vmatprep.subr.bf16.mxu0 0
    %334 = vmatpush2.bf16.msra.mxu0 0
    %335 = vmatprep.subr.bf16.mxu0 0
    %336 = vmatpush2.bf16.msra.mxu0 0
    %337 = vmatprep.subr.bf16.mxu0 0
    %338 = vmatpush2.bf16.msra.mxu0 0
    %339 = vmatprep.mubr.bf16.mxu0 0
    %340 = vmatmul.mubr.bf16.gmra.mxu0 %v196
    %v341 = vpop.f32.mrf.mxu0
    %v342 = vadd.f32 0.0, %v341
    %v343 = vpop.f32.mrf.mxu0
    %v344 = vadd.f32 0.0, %v343
    %v345 = vpop.f32.mrf.mxu0
    %v346 = vadd.f32 0.0, %v345
    %v347 = vpop.f32.mrf.mxu0
    %v348 = vadd.f32 0.0, %v347
    %349 = vmatprep.mubr.bf16.mxu0 0
    %350 = vmatmul.mubr.bf16.gmra.mxu0 %v199
    %v351 = vpop.f32.mrf.mxu0
    %v352 = vadd.f32 0.0, %v351
    %v353 = vpop.f32.mrf.mxu0
    %v354 = vadd.f32 0.0, %v353
    %v355 = vpop.f32.mrf.mxu0
    %v356 = vadd.f32 0.0, %v355
    %v357 = vpop.f32.mrf.mxu0
    %v358 = vadd.f32 0.0, %v357
    %359 = vdwg.mxu0
    %v360 = vmul.f32 %v236, %v37
    %v361 = vmul.f32 %v240, %v38
    %v362 = vmul.f32 %v246, %v39
    %v363 = vmul.f32 %v250, %v40
    %v364 = vmul.f32 %v238, %v43
    %v365 = vmul.f32 %v242, %v44
    %v366 = vmul.f32 %v248, %v45
    %v367 = vmul.f32 %v252, %v46
    %v368 = vadd.f32 %v360, %v364
    %v369 = vadd.f32 %v361, %v365
    %v370 = vadd.f32 %v362, %v366
    %v371 = vadd.f32 %v363, %v367
    %376 = vrot.lane.b32.xlu0 %v368, 112
    %v377 = vpop.permute.xlu0 %376
    %378 = vrot.lane.b32.xlu0 %v369, 112
    %v379 = vpop.permute.xlu0 %378
    %380 = vrot.lane.b32.xlu0 %v370, 112
    %v381 = vpop.permute.xlu0 %380
    %382 = vrot.lane.b32.xlu0 %v371, 112
    %v383 = vpop.permute.xlu0 %382
    %388 = vrot.lane.b32.xlu0 %v368, 96
    %v389 = vpop.permute.xlu0 %388
    %390 = vrot.lane.b32.xlu0 %v369, 96
    %v391 = vpop.permute.xlu0 %390
    %392 = vrot.lane.b32.xlu0 %v370, 96
    %v393 = vpop.permute.xlu0 %392
    %394 = vrot.lane.b32.xlu0 %v371, 96
    %v395 = vpop.permute.xlu0 %394
    %400 = vrot.lane.b32.xlu0 %v368, 80
    %v401 = vpop.permute.xlu0 %400
    %402 = vrot.lane.b32.xlu0 %v369, 80
    %v403 = vpop.permute.xlu0 %402
    %404 = vrot.lane.b32.xlu0 %v370, 80
    %v405 = vpop.permute.xlu0 %404
    %406 = vrot.lane.b32.xlu0 %v371, 80
    %v407 = vpop.permute.xlu0 %406
    %416 = vrot.lane.b32.xlu0 %v236, 112
    %v417 = vpop.permute.xlu0 %416
    %418 = vrot.lane.b32.xlu0 %v240, 112
    %v419 = vpop.permute.xlu0 %418
    %420 = vrot.lane.b32.xlu0 %v246, 112
    %v421 = vpop.permute.xlu0 %420
    %422 = vrot.lane.b32.xlu0 %v250, 112
    %v423 = vpop.permute.xlu0 %422
    %v428 = vpack.c.bf16 %v369, %v368
    %v429 = vpack.c.bf16 %v371, %v370
    %v430 = vpack.c.bf16 %v379, %v377
    %v431 = vpack.c.bf16 %v383, %v381
    %v432 = vpack.c.bf16 %v391, %v389
    %v433 = vpack.c.bf16 %v395, %v393
    %v434 = vpack.c.bf16 %v403, %v401
    %v435 = vpack.c.bf16 %v407, %v405
    %v436 = vpack.c.bf16 %v240, %v236
    %v437 = vpack.c.bf16 %v250, %v246
    %v438 = vpack.c.bf16 %v419, %v417
    %v439 = vpack.c.bf16 %v423, %v421
    %441 = vrot.lane.b32.xlu0 %v428, 64
    %v442 = vpop.permute.xlu0 %441
    %vm443 = vcmask 130048
    %v445 = vsel %vm443, %v428, 0
    %v448 = vsel %vm443, %v442, 0
    %450 = vmatprep.subr.bf16.mxu0 0
    %451 = vmatpush1.bf16.xpose.msra.mxu0 0
    %452 = vmatprep.subr.bf16.mxu0 0
    %453 = vmatpush1.bf16.xpose.msra.mxu0 0
    %454 = vmatprep.subr.bf16.mxu0 0
    %455 = vmatpush1.bf16.xpose.msra.mxu0 0
    %456 = vmatprep.subr.bf16.mxu0 0
    %457 = vmatpush1.bf16.xpose.msra.mxu0 0
    %458 = vmatprep.subr.bf16.mxu0 0
    %459 = vmatpush1.bf16.xpose.msra.mxu0 0
    %460 = vmatprep.subr.bf16.mxu0 0
    %461 = vmatpush1.bf16.xpose.msra.mxu0 0
    %462 = vmatprep.subr.bf16.mxu0 0
    %463 = vmatpush1.bf16.xpose.msra.mxu0 0
    %464 = vmatprep.subr.bf16.mxu0 0
    %465 = vmatpush1.bf16.xpose.msra.mxu0 %v448
    %466 = vmatprep.subr.bf16.mxu0 0
    %467 = vmatpush2.bf16.xpose.msra.mxu0 0
    %468 = vmatprep.subr.bf16.mxu0 0
    %469 = vmatpush2.bf16.xpose.msra.mxu0 0
    %470 = vmatprep.subr.bf16.mxu0 0
    %471 = vmatpush2.bf16.xpose.msra.mxu0 0
    %472 = vmatprep.subr.bf16.mxu0 0
    %473 = vmatpush2.bf16.xpose.msra.mxu0 0
    %474 = vmatprep.subr.bf16.mxu0 0
    %475 = vmatpush2.bf16.xpose.msra.mxu0 0
    %476 = vmatprep.subr.bf16.mxu0 0
    %477 = vmatpush2.bf16.xpose.msra.mxu0 0
    %478 = vmatprep.subr.bf16.mxu0 0
    %479 = vmatpush2.bf16.xpose.msra.mxu0 0
    %480 = vmatprep.subr.bf16.mxu0 0
    %481 = vmatpush2.bf16.xpose.msra.mxu0 0
    %482 = vmatprep.mubr.bf16.mxu0 0
    %483 = vmatmul.mubr.bf16.gmra.mxu0 %v445
    %v484 = vpop.f32.mrf.mxu0
    %v485 = vadd.f32 0.0, %v484
    %v486 = vpop.f32.mrf.mxu0
    %v487 = vpop.f32.mrf.mxu0
    %v488 = vadd.f32 0.0, %v487
    %v489 = vpop.f32.mrf.mxu0
    %490 = vdwg.mxu0
    %492 = vrot.lane.b32.xlu0 %v429, 64
    %v493 = vpop.permute.xlu0 %492
    %v495 = vsel %vm443, %v429, 0
    %v498 = vsel %vm443, %v493, 0
    %500 = vmatprep.subr.bf16.mxu0 0
    %501 = vmatpush1.bf16.xpose.msra.mxu0 0
    %502 = vmatprep.subr.bf16.mxu0 0
    %503 = vmatpush1.bf16.xpose.msra.mxu0 0
    %504 = vmatprep.subr.bf16.mxu0 0
    %505 = vmatpush1.bf16.xpose.msra.mxu0 0
    %506 = vmatprep.subr.bf16.mxu0 0
    %507 = vmatpush1.bf16.xpose.msra.mxu0 0
    %508 = vmatprep.subr.bf16.mxu0 0
    %509 = vmatpush1.bf16.xpose.msra.mxu0 0
    %510 = vmatprep.subr.bf16.mxu0 0
    %511 = vmatpush1.bf16.xpose.msra.mxu0 0
    %512 = vmatprep.subr.bf16.mxu0 0
    %513 = vmatpush1.bf16.xpose.msra.mxu0 0
    %514 = vmatprep.subr.bf16.mxu0 0
    %515 = vmatpush1.bf16.xpose.msra.mxu0 %v498
    %516 = vmatprep.subr.bf16.mxu0 0
    %517 = vmatpush2.bf16.xpose.msra.mxu0 0
    %518 = vmatprep.subr.bf16.mxu0 0
    %519 = vmatpush2.bf16.xpose.msra.mxu0 0
    %520 = vmatprep.subr.bf16.mxu0 0
    %521 = vmatpush2.bf16.xpose.msra.mxu0 0
    %522 = vmatprep.subr.bf16.mxu0 0
    %523 = vmatpush2.bf16.xpose.msra.mxu0 0
    %524 = vmatprep.subr.bf16.mxu0 0
    %525 = vmatpush2.bf16.xpose.msra.mxu0 0
    %526 = vmatprep.subr.bf16.mxu0 0
    %527 = vmatpush2.bf16.xpose.msra.mxu0 0
    %528 = vmatprep.subr.bf16.mxu0 0
    %529 = vmatpush2.bf16.xpose.msra.mxu0 0
    %530 = vmatprep.subr.bf16.mxu0 0
    %531 = vmatpush2.bf16.xpose.msra.mxu0 0
    %532 = vmatprep.mubr.bf16.mxu0 0
    %533 = vmatmul.mubr.bf16.gmra.mxu0 %v495
    %v534 = vpop.f32.mrf.mxu0
    %v535 = vadd.f32 0.0, %v534
    %v536 = vpop.f32.mrf.mxu0
    %v537 = vpop.f32.mrf.mxu0
    %v538 = vadd.f32 0.0, %v537
    %v539 = vpop.f32.mrf.mxu0
    %540 = vdwg.mxu0
    %v542 = vsel %vm443, %v430, 0
    %544 = vmatprep.subr.bf16.mxu0 0
    %545 = vmatpush1.bf16.xpose.msra.mxu0 0
    %546 = vmatprep.subr.bf16.mxu0 0
    %547 = vmatpush1.bf16.xpose.msra.mxu0 0
    %548 = vmatprep.subr.bf16.mxu0 0
    %549 = vmatpush1.bf16.xpose.msra.mxu0 0
    %550 = vmatprep.subr.bf16.mxu0 0
    %551 = vmatpush1.bf16.xpose.msra.mxu0 0
    %552 = vmatprep.subr.bf16.mxu0 0
    %553 = vmatpush1.bf16.xpose.msra.mxu0 0
    %554 = vmatprep.subr.bf16.mxu0 0
    %555 = vmatpush1.bf16.xpose.msra.mxu0 0
    %556 = vmatprep.subr.bf16.mxu0 0
    %557 = vmatpush1.bf16.xpose.msra.mxu0 0
    %558 = vmatprep.subr.bf16.mxu0 0
    %559 = vmatpush1.bf16.xpose.msra.mxu0 %v448
    %560 = vmatprep.subr.bf16.mxu0 0
    %561 = vmatpush2.bf16.xpose.msra.mxu0 0
    %562 = vmatprep.subr.bf16.mxu0 0
    %563 = vmatpush2.bf16.xpose.msra.mxu0 0
    %564 = vmatprep.subr.bf16.mxu0 0
    %565 = vmatpush2.bf16.xpose.msra.mxu0 0
    %566 = vmatprep.subr.bf16.mxu0 0
    %567 = vmatpush2.bf16.xpose.msra.mxu0 0
    %568 = vmatprep.subr.bf16.mxu0 0
    %569 = vmatpush2.bf16.xpose.msra.mxu0 0
    %570 = vmatprep.subr.bf16.mxu0 0
    %571 = vmatpush2.bf16.xpose.msra.mxu0 0
    %572 = vmatprep.subr.bf16.mxu0 0
    %573 = vmatpush2.bf16.xpose.msra.mxu0 0
    %574 = vmatprep.subr.bf16.mxu0 0
    %575 = vmatpush2.bf16.xpose.msra.mxu0 0
    %576 = vmatprep.mubr.bf16.mxu0 0
    %577 = vmatmul.mubr.bf16.gmra.mxu0 %v542
    %v578 = vpop.f32.mrf.mxu0
    %v579 = vadd.f32 0.0, %v578
    %v580 = vpop.f32.mrf.mxu0
    %v581 = vpop.f32.mrf.mxu0
    %v582 = vadd.f32 0.0, %v581
    %v583 = vpop.f32.mrf.mxu0
    %584 = vdwg.mxu0
    %v586 = vsel %vm443, %v431, 0
    %588 = vmatprep.subr.bf16.mxu0 0
    %589 = vmatpush1.bf16.xpose.msra.mxu0 0
    %590 = vmatprep.subr.bf16.mxu0 0
    %591 = vmatpush1.bf16.xpose.msra.mxu0 0
    %592 = vmatprep.subr.bf16.mxu0 0
    %593 = vmatpush1.bf16.xpose.msra.mxu0 0
    %594 = vmatprep.subr.bf16.mxu0 0
    %595 = vmatpush1.bf16.xpose.msra.mxu0 0
    %596 = vmatprep.subr.bf16.mxu0 0
    %597 = vmatpush1.bf16.xpose.msra.mxu0 0
    %598 = vmatprep.subr.bf16.mxu0 0
    %599 = vmatpush1.bf16.xpose.msra.mxu0 0
    %600 = vmatprep.subr.bf16.mxu0 0
    %601 = vmatpush1.bf16.xpose.msra.mxu0 0
    %602 = vmatprep.subr.bf16.mxu0 0
    %603 = vmatpush1.bf16.xpose.msra.mxu0 %v498
    %604 = vmatprep.subr.bf16.mxu0 0
    %605 = vmatpush2.bf16.xpose.msra.mxu0 0
    %606 = vmatprep.subr.bf16.mxu0 0
    %607 = vmatpush2.bf16.xpose.msra.mxu0 0
    %608 = vmatprep.subr.bf16.mxu0 0
    %609 = vmatpush2.bf16.xpose.msra.mxu0 0
    %610 = vmatprep.subr.bf16.mxu0 0
    %611 = vmatpush2.bf16.xpose.msra.mxu0 0
    %612 = vmatprep.subr.bf16.mxu0 0
    %613 = vmatpush2.bf16.xpose.msra.mxu0 0
    %614 = vmatprep.subr.bf16.mxu0 0
    %615 = vmatpush2.bf16.xpose.msra.mxu0 0
    %616 = vmatprep.subr.bf16.mxu0 0
    %617 = vmatpush2.bf16.xpose.msra.mxu0 0
    %618 = vmatprep.subr.bf16.mxu0 0
    %619 = vmatpush2.bf16.xpose.msra.mxu0 0
    %620 = vmatprep.mubr.bf16.mxu0 0
    %621 = vmatmul.mubr.bf16.gmra.mxu0 %v586
    %v622 = vpop.f32.mrf.mxu0
    %v623 = vadd.f32 0.0, %v622
    %v624 = vpop.f32.mrf.mxu0
    %v625 = vpop.f32.mrf.mxu0
    %v626 = vadd.f32 0.0, %v625
    %v627 = vpop.f32.mrf.mxu0
    %628 = vdwg.mxu0
    %630 = vrot.lane.b32.xlu0 %v430, 64
    %v631 = vpop.permute.xlu0 %630
    %v633 = vsel %vm443, %v432, 0
    %v636 = vsel %vm443, %v631, 0
    %638 = vmatprep.subr.bf16.mxu0 0
    %639 = vmatpush1.bf16.xpose.msra.mxu0 0
    %640 = vmatprep.subr.bf16.mxu0 0
    %641 = vmatpush1.bf16.xpose.msra.mxu0 0
    %642 = vmatprep.subr.bf16.mxu0 0
    %643 = vmatpush1.bf16.xpose.msra.mxu0 0
    %644 = vmatprep.subr.bf16.mxu0 0
    %645 = vmatpush1.bf16.xpose.msra.mxu0 0
    %646 = vmatprep.subr.bf16.mxu0 0
    %647 = vmatpush1.bf16.xpose.msra.mxu0 0
    %648 = vmatprep.subr.bf16.mxu0 0
    %649 = vmatpush1.bf16.xpose.msra.mxu0 0
    %650 = vmatprep.subr.bf16.mxu0 0
    %651 = vmatpush1.bf16.xpose.msra.mxu0 0
    %652 = vmatprep.subr.bf16.mxu0 0
    %653 = vmatpush1.bf16.xpose.msra.mxu0 %v636
    %654 = vmatprep.subr.bf16.mxu0 0
    %655 = vmatpush2.bf16.xpose.msra.mxu0 0
    %656 = vmatprep.subr.bf16.mxu0 0
    %657 = vmatpush2.bf16.xpose.msra.mxu0 0
    %658 = vmatprep.subr.bf16.mxu0 0
    %659 = vmatpush2.bf16.xpose.msra.mxu0 0
    %660 = vmatprep.subr.bf16.mxu0 0
    %661 = vmatpush2.bf16.xpose.msra.mxu0 0
    %662 = vmatprep.subr.bf16.mxu0 0
    %663 = vmatpush2.bf16.xpose.msra.mxu0 0
    %664 = vmatprep.subr.bf16.mxu0 0
    %665 = vmatpush2.bf16.xpose.msra.mxu0 0
    %666 = vmatprep.subr.bf16.mxu0 0
    %667 = vmatpush2.bf16.xpose.msra.mxu0 0
    %668 = vmatprep.subr.bf16.mxu0 0
    %669 = vmatpush2.bf16.xpose.msra.mxu0 0
    %670 = vmatprep.mubr.bf16.mxu0 0
    %671 = vmatmul.mubr.bf16.gmra.mxu0 %v633
    %v672 = vpop.f32.mrf.mxu0
    %v673 = vadd.f32 0.0, %v672
    %v674 = vpop.f32.mrf.mxu0
    %v675 = vpop.f32.mrf.mxu0
    %v676 = vadd.f32 0.0, %v675
    %v677 = vpop.f32.mrf.mxu0
    %678 = vdwg.mxu0
    %680 = vrot.lane.b32.xlu0 %v431, 64
    %v681 = vpop.permute.xlu0 %680
    %v683 = vsel %vm443, %v433, 0
    %v686 = vsel %vm443, %v681, 0
    %688 = vmatprep.subr.bf16.mxu0 0
    %689 = vmatpush1.bf16.xpose.msra.mxu0 0
    %690 = vmatprep.subr.bf16.mxu0 0
    %691 = vmatpush1.bf16.xpose.msra.mxu0 0
    %692 = vmatprep.subr.bf16.mxu0 0
    %693 = vmatpush1.bf16.xpose.msra.mxu0 0
    %694 = vmatprep.subr.bf16.mxu0 0
    %695 = vmatpush1.bf16.xpose.msra.mxu0 0
    %696 = vmatprep.subr.bf16.mxu0 0
    %697 = vmatpush1.bf16.xpose.msra.mxu0 0
    %698 = vmatprep.subr.bf16.mxu0 0
    %699 = vmatpush1.bf16.xpose.msra.mxu0 0
    %700 = vmatprep.subr.bf16.mxu0 0
    %701 = vmatpush1.bf16.xpose.msra.mxu0 0
    %702 = vmatprep.subr.bf16.mxu0 0
    %703 = vmatpush1.bf16.xpose.msra.mxu0 %v686
    %704 = vmatprep.subr.bf16.mxu0 0
    %705 = vmatpush2.bf16.xpose.msra.mxu0 0
    %706 = vmatprep.subr.bf16.mxu0 0
    %707 = vmatpush2.bf16.xpose.msra.mxu0 0
    %708 = vmatprep.subr.bf16.mxu0 0
    %709 = vmatpush2.bf16.xpose.msra.mxu0 0
    %710 = vmatprep.subr.bf16.mxu0 0
    %711 = vmatpush2.bf16.xpose.msra.mxu0 0
    %712 = vmatprep.subr.bf16.mxu0 0
    %713 = vmatpush2.bf16.xpose.msra.mxu0 0
    %714 = vmatprep.subr.bf16.mxu0 0
    %715 = vmatpush2.bf16.xpose.msra.mxu0 0
    %716 = vmatprep.subr.bf16.mxu0 0
    %717 = vmatpush2.bf16.xpose.msra.mxu0 0
    %718 = vmatprep.subr.bf16.mxu0 0
    %719 = vmatpush2.bf16.xpose.msra.mxu0 0
    %720 = vmatprep.mubr.bf16.mxu0 0
    %721 = vmatmul.mubr.bf16.gmra.mxu0 %v683
    %v722 = vpop.f32.mrf.mxu0
    %v723 = vadd.f32 0.0, %v722
    %v724 = vpop.f32.mrf.mxu0
    %v725 = vpop.f32.mrf.mxu0
    %v726 = vadd.f32 0.0, %v725
    %v727 = vpop.f32.mrf.mxu0
    %728 = vdwg.mxu0
    %v730 = vsel %vm443, %v434, 0
    %732 = vmatprep.subr.bf16.mxu0 0
    %733 = vmatpush1.bf16.xpose.msra.mxu0 0
    %734 = vmatprep.subr.bf16.mxu0 0
    %735 = vmatpush1.bf16.xpose.msra.mxu0 0
    %736 = vmatprep.subr.bf16.mxu0 0
    %737 = vmatpush1.bf16.xpose.msra.mxu0 0
    %738 = vmatprep.subr.bf16.mxu0 0
    %739 = vmatpush1.bf16.xpose.msra.mxu0 0
    %740 = vmatprep.subr.bf16.mxu0 0
    %741 = vmatpush1.bf16.xpose.msra.mxu0 0
    %742 = vmatprep.subr.bf16.mxu0 0
    %743 = vmatpush1.bf16.xpose.msra.mxu0 0
    %744 = vmatprep.subr.bf16.mxu0 0
    %745 = vmatpush1.bf16.xpose.msra.mxu0 0
    %746 = vmatprep.subr.bf16.mxu0 0
    %747 = vmatpush1.bf16.xpose.msra.mxu0 %v636
    %748 = vmatprep.subr.bf16.mxu0 0
    %749 = vmatpush2.bf16.xpose.msra.mxu0 0
    %750 = vmatprep.subr.bf16.mxu0 0
    %751 = vmatpush2.bf16.xpose.msra.mxu0 0
    %752 = vmatprep.subr.bf16.mxu0 0
    %753 = vmatpush2.bf16.xpose.msra.mxu0 0
    %754 = vmatprep.subr.bf16.mxu0 0
    %755 = vmatpush2.bf16.xpose.msra.mxu0 0
    %756 = vmatprep.subr.bf16.mxu0 0
    %757 = vmatpush2.bf16.xpose.msra.mxu0 0
    %758 = vmatprep.subr.bf16.mxu0 0
    %759 = vmatpush2.bf16.xpose.msra.mxu0 0
    %760 = vmatprep.subr.bf16.mxu0 0
    %761 = vmatpush2.bf16.xpose.msra.mxu0 0
    %762 = vmatprep.subr.bf16.mxu0 0
    %763 = vmatpush2.bf16.xpose.msra.mxu0 0
    %764 = vmatprep.mubr.bf16.mxu0 0
    %765 = vmatmul.mubr.bf16.gmra.mxu0 %v730
    %v766 = vpop.f32.mrf.mxu0
    %v767 = vadd.f32 0.0, %v766
    %v768 = vpop.f32.mrf.mxu0
    %v769 = vpop.f32.mrf.mxu0
    %v770 = vadd.f32 0.0, %v769
    %v771 = vpop.f32.mrf.mxu0
    %772 = vdwg.mxu0
    %v774 = vsel %vm443, %v435, 0
    %776 = vmatprep.subr.bf16.mxu0 0
    %777 = vmatpush1.bf16.xpose.msra.mxu0 0
    %778 = vmatprep.subr.bf16.mxu0 0
    %779 = vmatpush1.bf16.xpose.msra.mxu0 0
    %780 = vmatprep.subr.bf16.mxu0 0
    %781 = vmatpush1.bf16.xpose.msra.mxu0 0
    %782 = vmatprep.subr.bf16.mxu0 0
    %783 = vmatpush1.bf16.xpose.msra.mxu0 0
    %784 = vmatprep.subr.bf16.mxu0 0
    %785 = vmatpush1.bf16.xpose.msra.mxu0 0
    %786 = vmatprep.subr.bf16.mxu0 0
    %787 = vmatpush1.bf16.xpose.msra.mxu0 0
    %788 = vmatprep.subr.bf16.mxu0 0
    %789 = vmatpush1.bf16.xpose.msra.mxu0 0
    %790 = vmatprep.subr.bf16.mxu0 0
    %791 = vmatpush1.bf16.xpose.msra.mxu0 %v686
    %792 = vmatprep.subr.bf16.mxu0 0
    %793 = vmatpush2.bf16.xpose.msra.mxu0 0
    %794 = vmatprep.subr.bf16.mxu0 0
    %795 = vmatpush2.bf16.xpose.msra.mxu0 0
    %796 = vmatprep.subr.bf16.mxu0 0
    %797 = vmatpush2.bf16.xpose.msra.mxu0 0
    %798 = vmatprep.subr.bf16.mxu0 0
    %799 = vmatpush2.bf16.xpose.msra.mxu0 0
    %800 = vmatprep.subr.bf16.mxu0 0
    %801 = vmatpush2.bf16.xpose.msra.mxu0 0
    %802 = vmatprep.subr.bf16.mxu0 0
    %803 = vmatpush2.bf16.xpose.msra.mxu0 0
    %804 = vmatprep.subr.bf16.mxu0 0
    %805 = vmatpush2.bf16.xpose.msra.mxu0 0
    %806 = vmatprep.subr.bf16.mxu0 0
    %807 = vmatpush2.bf16.xpose.msra.mxu0 0
    %808 = vmatprep.mubr.bf16.mxu0 0
    %809 = vmatmul.mubr.bf16.gmra.mxu0 %v774
    %v810 = vpop.f32.mrf.mxu0
    %v811 = vadd.f32 0.0, %v810
    %v812 = vpop.f32.mrf.mxu0
    %v813 = vpop.f32.mrf.mxu0
    %v814 = vadd.f32 0.0, %v813
    %v815 = vpop.f32.mrf.mxu0
    %816 = vdwg.mxu0
    %v817 = vlaneseq
    %v818 = vshrl.u32 %v817, 7
    %v819 = vadd.s32 %v818, 8
    %v820 = vlaneseq
    %v821 = vand.u32 %v820, 127
    %vm822 = vcmp.le.s32.totalorder %v821, %v818
    %vm823 = vcmp.le.s32.totalorder %v821, %v819
    %v824 = vsel %vm822, %v485, -1e+30
    %v825 = vsel %vm823, %v488, -1e+30
    %v826 = vsel %vm822, %v535, -1e+30
    %v827 = vsel %vm823, %v538, -1e+30
    %v828 = vsel %vm822, %v579, -1e+30
    %v829 = vsel %vm823, %v582, -1e+30
    %v830 = vsel %vm822, %v623, -1e+30
    %v831 = vsel %vm823, %v626, -1e+30
    %v832 = vsel %vm822, %v673, -1e+30
    %v833 = vsel %vm823, %v676, -1e+30
    %v834 = vsel %vm822, %v723, -1e+30
    %v835 = vsel %vm823, %v726, -1e+30
    %v836 = vsel %vm822, %v767, -1e+30
    %v837 = vsel %vm823, %v770, -1e+30
    %v838 = vsel %vm822, %v811, -1e+30
    %v839 = vsel %vm823, %v814, -1e+30
    %v840 = vsel %vm443, %v824, -inf
    %841 = vmax.xlane.f32.xlu0 %v840
    %v842 = vpop.xlane.xlu0 %841
    %v843 = vsel %vm443, %v825, -inf
    %844 = vmax.xlane.f32.xlu0 %v843
    %v845 = vpop.xlane.xlu0 %844
    %v846 = vsel %vm443, %v826, -inf
    %847 = vmax.xlane.f32.xlu0 %v846
    %v848 = vpop.xlane.xlu0 %847
    %v849 = vsel %vm443, %v827, -inf
    %850 = vmax.xlane.f32.xlu0 %v849
    %v851 = vpop.xlane.xlu0 %850
    %v852 = vsel %vm443, %v828, -inf
    %853 = vmax.xlane.f32.xlu0 %v852
    %v854 = vpop.xlane.xlu0 %853
    %v855 = vsel %vm443, %v829, -inf
    %856 = vmax.xlane.f32.xlu0 %v855
    %v857 = vpop.xlane.xlu0 %856
    %v858 = vsel %vm443, %v830, -inf
    %859 = vmax.xlane.f32.xlu0 %v858
    %v860 = vpop.xlane.xlu0 %859
    %v861 = vsel %vm443, %v831, -inf
    %862 = vmax.xlane.f32.xlu0 %v861
    %v863 = vpop.xlane.xlu0 %862
    %v864 = vsel %vm443, %v832, -inf
    %865 = vmax.xlane.f32.xlu0 %v864
    %v866 = vpop.xlane.xlu0 %865
    %v867 = vsel %vm443, %v833, -inf
    %868 = vmax.xlane.f32.xlu0 %v867
    %v869 = vpop.xlane.xlu0 %868
    %v870 = vsel %vm443, %v834, -inf
    %871 = vmax.xlane.f32.xlu0 %v870
    %v872 = vpop.xlane.xlu0 %871
    %v873 = vsel %vm443, %v835, -inf
    %874 = vmax.xlane.f32.xlu0 %v873
    %v875 = vpop.xlane.xlu0 %874
    %v876 = vsel %vm443, %v836, -inf
    %877 = vmax.xlane.f32.xlu0 %v876
    %v878 = vpop.xlane.xlu0 %877
    %v879 = vsel %vm443, %v837, -inf
    %880 = vmax.xlane.f32.xlu0 %v879
    %v881 = vpop.xlane.xlu0 %880
    %v882 = vsel %vm443, %v838, -inf
    %883 = vmax.xlane.f32.xlu0 %v882
    %v884 = vpop.xlane.xlu0 %883
    %v885 = vsel %vm443, %v839, -inf
    %886 = vmax.xlane.f32.xlu0 %v885
    %v887 = vpop.xlane.xlu0 %886
    %v888 = vsub.f32 %v824, %v842
    %v889 = vsub.f32 %v825, %v845
    %v890 = vsub.f32 %v826, %v848
    %v891 = vsub.f32 %v827, %v851
    %v892 = vsub.f32 %v828, %v854
    %v893 = vsub.f32 %v829, %v857
    %v894 = vsub.f32 %v830, %v860
    %v895 = vsub.f32 %v831, %v863
    %v896 = vsub.f32 %v832, %v866
    %v897 = vsub.f32 %v833, %v869
    %v898 = vsub.f32 %v834, %v872
    %v899 = vsub.f32 %v835, %v875
    %v900 = vsub.f32 %v836, %v878
    %v901 = vsub.f32 %v837, %v881
    %v902 = vsub.f32 %v838, %v884
    %v903 = vsub.f32 %v839, %v887
    %v904 = vmul.f32 %v888, 1.442695
    %v905 = vpow.pop %v904
    %v906 = vmul.f32 %v889, 1.442695
    %v907 = vpow.pop %v906
    %v908 = vmul.f32 %v890, 1.442695
    %v909 = vpow.pop %v908
    %v910 = vmul.f32 %v891, 1.442695
    %v911 = vpow.pop %v910
    %v912 = vmul.f32 %v892, 1.442695
    %v913 = vpow.pop %v912
    %v914 = vmul.f32 %v893, 1.442695
    %v915 = vpow.pop %v914
    %v916 = vmul.f32 %v894, 1.442695
    %v917 = vpow.pop %v916
    %v918 = vmul.f32 %v895, 1.442695
    %v919 = vpow.pop %v918
    %v920 = vmul.f32 %v896, 1.442695
    %v921 = vpow.pop %v920
    %v922 = vmul.f32 %v897, 1.442695
    %v923 = vpow.pop %v922
    %v924 = vmul.f32 %v898, 1.442695
    %v925 = vpow.pop %v924
    %v926 = vmul.f32 %v899, 1.442695
    %v927 = vpow.pop %v926
    %v928 = vmul.f32 %v900, 1.442695
    %v929 = vpow.pop %v928
    %v930 = vmul.f32 %v901, 1.442695
    %v931 = vpow.pop %v930
    %v932 = vmul.f32 %v902, 1.442695
    %v933 = vpow.pop %v932
    %v934 = vmul.f32 %v903, 1.442695
    %v935 = vpow.pop %v934
    %v936 = vsel %vm443, %v905, 0.0
    %937 = vadd.xlane.f32.xlu0 %v936
    %v938 = vpop.xlane.xlu0 %937
    %v939 = vsel %vm443, %v907, 0.0
    %940 = vadd.xlane.f32.xlu0 %v939
    %v941 = vpop.xlane.xlu0 %940
    %v942 = vsel %vm443, %v909, 0.0
    %943 = vadd.xlane.f32.xlu0 %v942
    %v944 = vpop.xlane.xlu0 %943
    %v945 = vsel %vm443, %v911, 0.0
    %946 = vadd.xlane.f32.xlu0 %v945
    %v947 = vpop.xlane.xlu0 %946
    %v948 = vsel %vm443, %v913, 0.0
    %949 = vadd.xlane.f32.xlu0 %v948
    %v950 = vpop.xlane.xlu0 %949
    %v951 = vsel %vm443, %v915, 0.0
    %952 = vadd.xlane.f32.xlu0 %v951
    %v953 = vpop.xlane.xlu0 %952
    %v954 = vsel %vm443, %v917, 0.0
    %955 = vadd.xlane.f32.xlu0 %v954
    %v956 = vpop.xlane.xlu0 %955
    %v957 = vsel %vm443, %v919, 0.0
    %958 = vadd.xlane.f32.xlu0 %v957
    %v959 = vpop.xlane.xlu0 %958
    %v960 = vsel %vm443, %v921, 0.0
    %961 = vadd.xlane.f32.xlu0 %v960
    %v962 = vpop.xlane.xlu0 %961
    %v963 = vsel %vm443, %v923, 0.0
    %964 = vadd.xlane.f32.xlu0 %v963
    %v965 = vpop.xlane.xlu0 %964
    %v966 = vsel %vm443, %v925, 0.0
    %967 = vadd.xlane.f32.xlu0 %v966
    %v968 = vpop.xlane.xlu0 %967
    %v969 = vsel %vm443, %v927, 0.0
    %970 = vadd.xlane.f32.xlu0 %v969
    %v971 = vpop.xlane.xlu0 %970
    %v972 = vsel %vm443, %v929, 0.0
    %973 = vadd.xlane.f32.xlu0 %v972
    %v974 = vpop.xlane.xlu0 %973
    %v975 = vsel %vm443, %v931, 0.0
    %976 = vadd.xlane.f32.xlu0 %v975
    %v977 = vpop.xlane.xlu0 %976
    %v978 = vsel %vm443, %v933, 0.0
    %979 = vadd.xlane.f32.xlu0 %v978
    %v980 = vpop.xlane.xlu0 %979
    %v981 = vsel %vm443, %v935, 0.0
    %982 = vadd.xlane.f32.xlu0 %v981
    %v983 = vpop.xlane.xlu0 %982
    %v984 = vrcp.pop %v938
    %v985 = vrcp.pop %v941
    %v986 = vrcp.pop %v944
    %v987 = vrcp.pop %v947
    %v988 = vrcp.pop %v950
    %v989 = vrcp.pop %v953
    %v990 = vrcp.pop %v956
    %v991 = vrcp.pop %v959
    %v992 = vrcp.pop %v962
    %v993 = vrcp.pop %v965
    %v994 = vrcp.pop %v968
    %v995 = vrcp.pop %v971
    %v996 = vrcp.pop %v974
    %v997 = vrcp.pop %v977
    %v998 = vrcp.pop %v980
    %v999 = vrcp.pop %v983
    %v1000 = vmul.f32 %v905, %v984
    %v1001 = vmul.f32 %v907, %v985
    %v1002 = vmul.f32 %v909, %v986
    %v1003 = vmul.f32 %v911, %v987
    %v1004 = vmul.f32 %v913, %v988
    %v1005 = vmul.f32 %v915, %v989
    %v1006 = vmul.f32 %v917, %v990
    %v1007 = vmul.f32 %v919, %v991
    %v1008 = vmul.f32 %v921, %v992
    %v1009 = vmul.f32 %v923, %v993
    %v1010 = vmul.f32 %v925, %v994
    %v1011 = vmul.f32 %v927, %v995
    %v1012 = vmul.f32 %v929, %v996
    %v1013 = vmul.f32 %v931, %v997
    %v1014 = vmul.f32 %v933, %v998
    %v1015 = vmul.f32 %v935, %v999
    %v1016 = vpack.c.bf16 %v1001, %v1000
    %v1017 = vpack.c.bf16 %v1003, %v1002
    %v1018 = vpack.c.bf16 %v1005, %v1004
    %v1019 = vpack.c.bf16 %v1007, %v1006
    %v1020 = vpack.c.bf16 %v1009, %v1008
    %v1021 = vpack.c.bf16 %v1011, %v1010
    %v1022 = vpack.c.bf16 %v1013, %v1012
    %v1023 = vpack.c.bf16 %v1015, %v1014
    %1025 = vrot.lane.b32.xlu0 %v436, 32
    %v1026 = vpop.permute.xlu0 %1025
    %v1029 = vsel %vm443, %v1016, 0
    %1031 = vmatprep.subr.bf16.mxu0 0
    %1032 = vmatpush1.bf16.msra.mxu0 0
    %1033 = vmatprep.subr.bf16.mxu0 0
    %1034 = vmatpush1.bf16.msra.mxu0 0
    %1035 = vmatprep.subr.bf16.mxu0 0
    %1036 = vmatpush1.bf16.msra.mxu0 0
    %1037 = vmatprep.subr.bf16.mxu0 0
    %1038 = vmatpush1.bf16.msra.mxu0 0
    %1039 = vmatprep.subr.bf16.mxu0 0
    %1040 = vmatpush1.bf16.msra.mxu0 0
    %1041 = vmatprep.subr.bf16.mxu0 0
    %1042 = vmatpush1.bf16.msra.mxu0 0
    %1043 = vmatprep.subr.bf16.mxu0 0
    %1044 = vmatpush1.bf16.msra.mxu0 0
    %1045 = vmatprep.subr.bf16.mxu0 0
    %1046 = vmatpush1.bf16.msra.mxu0 %v1026
    %1047 = vmatprep.subr.bf16.mxu0 0
    %1048 = vmatpush2.bf16.msra.mxu0 0
    %1049 = vmatprep.subr.bf16.mxu0 0
    %1050 = vmatpush2.bf16.msra.mxu0 0
    %1051 = vmatprep.subr.bf16.mxu0 0
    %1052 = vmatpush2.bf16.msra.mxu0 0
    %1053 = vmatprep.subr.bf16.mxu0 0
    %1054 = vmatpush2.bf16.msra.mxu0 0
    %1055 = vmatprep.subr.bf16.mxu0 0
    %1056 = vmatpush2.bf16.msra.mxu0 0
    %1057 = vmatprep.subr.bf16.mxu0 0
    %1058 = vmatpush2.bf16.msra.mxu0 0
    %1059 = vmatprep.subr.bf16.mxu0 0
    %1060 = vmatpush2.bf16.msra.mxu0 0
    %1061 = vmatprep.subr.bf16.mxu0 0
    %1062 = vmatpush2.bf16.msra.mxu0 0
    %1063 = vmatprep.mubr.bf16.mxu0 0
    %1064 = vmatmul.mubr.bf16.gmra.mxu0 %v1029
    %v1065 = vpop.f32.mrf.mxu0
    %v1066 = vadd.f32 0.0, %v1065
    %v1067 = vpop.f32.mrf.mxu0
    %v1068 = vpop.f32.mrf.mxu0
    %v1069 = vadd.f32 0.0, %v1068
    %v1070 = vpop.f32.mrf.mxu0
    %1071 = vdwg.mxu0
    %1073 = vrot.lane.b32.xlu0 %v437, 32
    %v1074 = vpop.permute.xlu0 %1073
    %v1077 = vsel %vm443, %v1017, 0
    %1079 = vmatprep.subr.bf16.mxu0 0
    %1080 = vmatpush1.bf16.msra.mxu0 0
    %1081 = vmatprep.subr.bf16.mxu0 0
    %1082 = vmatpush1.bf16.msra.mxu0 0
    %1083 = vmatprep.subr.bf16.mxu0 0
    %1084 = vmatpush1.bf16.msra.mxu0 0
    %1085 = vmatprep.subr.bf16.mxu0 0
    %1086 = vmatpush1.bf16.msra.mxu0 0
    %1087 = vmatprep.subr.bf16.mxu0 0
    %1088 = vmatpush1.bf16.msra.mxu0 0
    %1089 = vmatprep.subr.bf16.mxu0 0
    %1090 = vmatpush1.bf16.msra.mxu0 0
    %1091 = vmatprep.subr.bf16.mxu0 0
    %1092 = vmatpush1.bf16.msra.mxu0 0
    %1093 = vmatprep.subr.bf16.mxu0 0
    %1094 = vmatpush1.bf16.msra.mxu0 %v1074
    %1095 = vmatprep.subr.bf16.mxu0 0
    %1096 = vmatpush2.bf16.msra.mxu0 0
    %1097 = vmatprep.subr.bf16.mxu0 0
    %1098 = vmatpush2.bf16.msra.mxu0 0
    %1099 = vmatprep.subr.bf16.mxu0 0
    %1100 = vmatpush2.bf16.msra.mxu0 0
    %1101 = vmatprep.subr.bf16.mxu0 0
    %1102 = vmatpush2.bf16.msra.mxu0 0
    %1103 = vmatprep.subr.bf16.mxu0 0
    %1104 = vmatpush2.bf16.msra.mxu0 0
    %1105 = vmatprep.subr.bf16.mxu0 0
    %1106 = vmatpush2.bf16.msra.mxu0 0
    %1107 = vmatprep.subr.bf16.mxu0 0
    %1108 = vmatpush2.bf16.msra.mxu0 0
    %1109 = vmatprep.subr.bf16.mxu0 0
    %1110 = vmatpush2.bf16.msra.mxu0 0
    %1111 = vmatprep.mubr.bf16.mxu0 0
    %1112 = vmatmul.mubr.bf16.gmra.mxu0 %v1077
    %v1113 = vpop.f32.mrf.mxu0
    %v1114 = vadd.f32 0.0, %v1113
    %v1115 = vpop.f32.mrf.mxu0
    %v1116 = vpop.f32.mrf.mxu0
    %v1117 = vadd.f32 0.0, %v1116
    %v1118 = vpop.f32.mrf.mxu0
    %1119 = vdwg.mxu0
    %v1121 = vsel %vm443, %v1018, 0
    %1123 = vmatprep.subr.bf16.mxu0 0
    %1124 = vmatpush1.bf16.msra.mxu0 0
    %1125 = vmatprep.subr.bf16.mxu0 0
    %1126 = vmatpush1.bf16.msra.mxu0 0
    %1127 = vmatprep.subr.bf16.mxu0 0
    %1128 = vmatpush1.bf16.msra.mxu0 0
    %1129 = vmatprep.subr.bf16.mxu0 0
    %1130 = vmatpush1.bf16.msra.mxu0 0
    %1131 = vmatprep.subr.bf16.mxu0 0
    %1132 = vmatpush1.bf16.msra.mxu0 0
    %1133 = vmatprep.subr.bf16.mxu0 0
    %1134 = vmatpush1.bf16.msra.mxu0 0
    %1135 = vmatprep.subr.bf16.mxu0 0
    %1136 = vmatpush1.bf16.msra.mxu0 0
    %1137 = vmatprep.subr.bf16.mxu0 0
    %1138 = vmatpush1.bf16.msra.mxu0 %v1026
    %1139 = vmatprep.subr.bf16.mxu0 0
    %1140 = vmatpush2.bf16.msra.mxu0 0
    %1141 = vmatprep.subr.bf16.mxu0 0
    %1142 = vmatpush2.bf16.msra.mxu0 0
    %1143 = vmatprep.subr.bf16.mxu0 0
    %1144 = vmatpush2.bf16.msra.mxu0 0
    %1145 = vmatprep.subr.bf16.mxu0 0
    %1146 = vmatpush2.bf16.msra.mxu0 0
    %1147 = vmatprep.subr.bf16.mxu0 0
    %1148 = vmatpush2.bf16.msra.mxu0 0
    %1149 = vmatprep.subr.bf16.mxu0 0
    %1150 = vmatpush2.bf16.msra.mxu0 0
    %1151 = vmatprep.subr.bf16.mxu0 0
    %1152 = vmatpush2.bf16.msra.mxu0 0
    %1153 = vmatprep.subr.bf16.mxu0 0
    %1154 = vmatpush2.bf16.msra.mxu0 0
    %1155 = vmatprep.mubr.bf16.mxu0 0
    %1156 = vmatmul.mubr.bf16.gmra.mxu0 %v1121
    %v1157 = vpop.f32.mrf.mxu0
    %v1158 = vadd.f32 0.0, %v1157
    %v1159 = vpop.f32.mrf.mxu0
    %v1160 = vpop.f32.mrf.mxu0
    %v1161 = vadd.f32 0.0, %v1160
    %v1162 = vpop.f32.mrf.mxu0
    %1163 = vdwg.mxu0
    %v1165 = vsel %vm443, %v1019, 0
    %1167 = vmatprep.subr.bf16.mxu0 0
    %1168 = vmatpush1.bf16.msra.mxu0 0
    %1169 = vmatprep.subr.bf16.mxu0 0
    %1170 = vmatpush1.bf16.msra.mxu0 0
    %1171 = vmatprep.subr.bf16.mxu0 0
    %1172 = vmatpush1.bf16.msra.mxu0 0
    %1173 = vmatprep.subr.bf16.mxu0 0
    %1174 = vmatpush1.bf16.msra.mxu0 0
    %1175 = vmatprep.subr.bf16.mxu0 0
    %1176 = vmatpush1.bf16.msra.mxu0 0
    %1177 = vmatprep.subr.bf16.mxu0 0
    %1178 = vmatpush1.bf16.msra.mxu0 0
    %1179 = vmatprep.subr.bf16.mxu0 0
    %1180 = vmatpush1.bf16.msra.mxu0 0
    %1181 = vmatprep.subr.bf16.mxu0 0
    %1182 = vmatpush1.bf16.msra.mxu0 %v1074
    %1183 = vmatprep.subr.bf16.mxu0 0
    %1184 = vmatpush2.bf16.msra.mxu0 0
    %1185 = vmatprep.subr.bf16.mxu0 0
    %1186 = vmatpush2.bf16.msra.mxu0 0
    %1187 = vmatprep.subr.bf16.mxu0 0
    %1188 = vmatpush2.bf16.msra.mxu0 0
    %1189 = vmatprep.subr.bf16.mxu0 0
    %1190 = vmatpush2.bf16.msra.mxu0 0
    %1191 = vmatprep.subr.bf16.mxu0 0
    %1192 = vmatpush2.bf16.msra.mxu0 0
    %1193 = vmatprep.subr.bf16.mxu0 0
    %1194 = vmatpush2.bf16.msra.mxu0 0
    %1195 = vmatprep.subr.bf16.mxu0 0
    %1196 = vmatpush2.bf16.msra.mxu0 0
    %1197 = vmatprep.subr.bf16.mxu0 0
    %1198 = vmatpush2.bf16.msra.mxu0 0
    %1199 = vmatprep.mubr.bf16.mxu0 0
    %1200 = vmatmul.mubr.bf16.gmra.mxu0 %v1165
    %v1201 = vpop.f32.mrf.mxu0
    %v1202 = vadd.f32 0.0, %v1201
    %v1203 = vpop.f32.mrf.mxu0
    %v1204 = vpop.f32.mrf.mxu0
    %v1205 = vadd.f32 0.0, %v1204
    %v1206 = vpop.f32.mrf.mxu0
    %1207 = vdwg.mxu0
    %1209 = vrot.lane.b32.xlu0 %v438, 32
    %v1210 = vpop.permute.xlu0 %1209
    %v1213 = vsel %vm443, %v1020, 0
    %1215 = vmatprep.subr.bf16.mxu0 0
    %1216 = vmatpush1.bf16.msra.mxu0 0
    %1217 = vmatprep.subr.bf16.mxu0 0
    %1218 = vmatpush1.bf16.msra.mxu0 0
    %1219 = vmatprep.subr.bf16.mxu0 0
    %1220 = vmatpush1.bf16.msra.mxu0 0
    %1221 = vmatprep.subr.bf16.mxu0 0
    %1222 = vmatpush1.bf16.msra.mxu0 0
    %1223 = vmatprep.subr.bf16.mxu0 0
    %1224 = vmatpush1.bf16.msra.mxu0 0
    %1225 = vmatprep.subr.bf16.mxu0 0
    %1226 = vmatpush1.bf16.msra.mxu0 0
    %1227 = vmatprep.subr.bf16.mxu0 0
    %1228 = vmatpush1.bf16.msra.mxu0 0
    %1229 = vmatprep.subr.bf16.mxu0 0
    %1230 = vmatpush1.bf16.msra.mxu0 %v1210
    %1231 = vmatprep.subr.bf16.mxu0 0
    %1232 = vmatpush2.bf16.msra.mxu0 0
    %1233 = vmatprep.subr.bf16.mxu0 0
    %1234 = vmatpush2.bf16.msra.mxu0 0
    %1235 = vmatprep.subr.bf16.mxu0 0
    %1236 = vmatpush2.bf16.msra.mxu0 0
    %1237 = vmatprep.subr.bf16.mxu0 0
    %1238 = vmatpush2.bf16.msra.mxu0 0
    %1239 = vmatprep.subr.bf16.mxu0 0
    %1240 = vmatpush2.bf16.msra.mxu0 0
    %1241 = vmatprep.subr.bf16.mxu0 0
    %1242 = vmatpush2.bf16.msra.mxu0 0
    %1243 = vmatprep.subr.bf16.mxu0 0
    %1244 = vmatpush2.bf16.msra.mxu0 0
    %1245 = vmatprep.subr.bf16.mxu0 0
    %1246 = vmatpush2.bf16.msra.mxu0 0
    %1247 = vmatprep.mubr.bf16.mxu0 0
    %1248 = vmatmul.mubr.bf16.gmra.mxu0 %v1213
    %v1249 = vpop.f32.mrf.mxu0
    %v1250 = vadd.f32 0.0, %v1249
    %v1251 = vpop.f32.mrf.mxu0
    %v1252 = vpop.f32.mrf.mxu0
    %v1253 = vadd.f32 0.0, %v1252
    %v1254 = vpop.f32.mrf.mxu0
    %1255 = vdwg.mxu0
    %1257 = vrot.lane.b32.xlu0 %v439, 32
    %v1258 = vpop.permute.xlu0 %1257
    %v1261 = vsel %vm443, %v1021, 0
    %1263 = vmatprep.subr.bf16.mxu0 0
    %1264 = vmatpush1.bf16.msra.mxu0 0
    %1265 = vmatprep.subr.bf16.mxu0 0
    %1266 = vmatpush1.bf16.msra.mxu0 0
    %1267 = vmatprep.subr.bf16.mxu0 0
    %1268 = vmatpush1.bf16.msra.mxu0 0
    %1269 = vmatprep.subr.bf16.mxu0 0
    %1270 = vmatpush1.bf16.msra.mxu0 0
    %1271 = vmatprep.subr.bf16.mxu0 0
    %1272 = vmatpush1.bf16.msra.mxu0 0
    %1273 = vmatprep.subr.bf16.mxu0 0
    %1274 = vmatpush1.bf16.msra.mxu0 0
    %1275 = vmatprep.subr.bf16.mxu0 0
    %1276 = vmatpush1.bf16.msra.mxu0 0
    %1277 = vmatprep.subr.bf16.mxu0 0
    %1278 = vmatpush1.bf16.msra.mxu0 %v1258
    %1279 = vmatprep.subr.bf16.mxu0 0
    %1280 = vmatpush2.bf16.msra.mxu0 0
    %1281 = vmatprep.subr.bf16.mxu0 0
    %1282 = vmatpush2.bf16.msra.mxu0 0
    %1283 = vmatprep.subr.bf16.mxu0 0
    %1284 = vmatpush2.bf16.msra.mxu0 0
    %1285 = vmatprep.subr.bf16.mxu0 0
    %1286 = vmatpush2.bf16.msra.mxu0 0
    %1287 = vmatprep.subr.bf16.mxu0 0
    %1288 = vmatpush2.bf16.msra.mxu0 0
    %1289 = vmatprep.subr.bf16.mxu0 0
    %1290 = vmatpush2.bf16.msra.mxu0 0
    %1291 = vmatprep.subr.bf16.mxu0 0
    %1292 = vmatpush2.bf16.msra.mxu0 0
    %1293 = vmatprep.subr.bf16.mxu0 0
    %1294 = vmatpush2.bf16.msra.mxu0 0
    %1295 = vmatprep.mubr.bf16.mxu0 0
    %1296 = vmatmul.mubr.bf16.gmra.mxu0 %v1261
    %v1297 = vpop.f32.mrf.mxu0
    %v1298 = vadd.f32 0.0, %v1297
    %v1299 = vpop.f32.mrf.mxu0
    %v1300 = vpop.f32.mrf.mxu0
    %v1301 = vadd.f32 0.0, %v1300
    %v1302 = vpop.f32.mrf.mxu0
    %1303 = vdwg.mxu0
    %v1305 = vsel %vm443, %v1022, 0
    %1307 = vmatprep.subr.bf16.mxu0 0
    %1308 = vmatpush1.bf16.msra.mxu0 0
    %1309 = vmatprep.subr.bf16.mxu0 0
    %1310 = vmatpush1.bf16.msra.mxu0 0
    %1311 = vmatprep.subr.bf16.mxu0 0
    %1312 = vmatpush1.bf16.msra.mxu0 0
    %1313 = vmatprep.subr.bf16.mxu0 0
    %1314 = vmatpush1.bf16.msra.mxu0 0
    %1315 = vmatprep.subr.bf16.mxu0 0
    %1316 = vmatpush1.bf16.msra.mxu0 0
    %1317 = vmatprep.subr.bf16.mxu0 0
    %1318 = vmatpush1.bf16.msra.mxu0 0
    %1319 = vmatprep.subr.bf16.mxu0 0
    %1320 = vmatpush1.bf16.msra.mxu0 0
    %1321 = vmatprep.subr.bf16.mxu0 0
    %1322 = vmatpush1.bf16.msra.mxu0 %v1210
    %1323 = vmatprep.subr.bf16.mxu0 0
    %1324 = vmatpush2.bf16.msra.mxu0 0
    %1325 = vmatprep.subr.bf16.mxu0 0
    %1326 = vmatpush2.bf16.msra.mxu0 0
    %1327 = vmatprep.subr.bf16.mxu0 0
    %1328 = vmatpush2.bf16.msra.mxu0 0
    %1329 = vmatprep.subr.bf16.mxu0 0
    %1330 = vmatpush2.bf16.msra.mxu0 0
    %1331 = vmatprep.subr.bf16.mxu0 0
    %1332 = vmatpush2.bf16.msra.mxu0 0
    %1333 = vmatprep.subr.bf16.mxu0 0
    %1334 = vmatpush2.bf16.msra.mxu0 0
    %1335 = vmatprep.subr.bf16.mxu0 0
    %1336 = vmatpush2.bf16.msra.mxu0 0
    %1337 = vmatprep.subr.bf16.mxu0 0
    %1338 = vmatpush2.bf16.msra.mxu0 0
    %1339 = vmatprep.mubr.bf16.mxu0 0
    %1340 = vmatmul.mubr.bf16.gmra.mxu0 %v1305
    %v1341 = vpop.f32.mrf.mxu0
    %v1342 = vadd.f32 0.0, %v1341
    %v1343 = vpop.f32.mrf.mxu0
    %v1344 = vpop.f32.mrf.mxu0
    %v1345 = vadd.f32 0.0, %v1344
    %v1346 = vpop.f32.mrf.mxu0
    %1347 = vdwg.mxu0
    %v1349 = vsel %vm443, %v1023, 0
    %1351 = vmatprep.subr.bf16.mxu0 0
    %1352 = vmatpush1.bf16.msra.mxu0 0
    %1353 = vmatprep.subr.bf16.mxu0 0
    %1354 = vmatpush1.bf16.msra.mxu0 0
    %1355 = vmatprep.subr.bf16.mxu0 0
    %1356 = vmatpush1.bf16.msra.mxu0 0
    %1357 = vmatprep.subr.bf16.mxu0 0
    %1358 = vmatpush1.bf16.msra.mxu0 0
    %1359 = vmatprep.subr.bf16.mxu0 0
    %1360 = vmatpush1.bf16.msra.mxu0 0
    %1361 = vmatprep.subr.bf16.mxu0 0
    %1362 = vmatpush1.bf16.msra.mxu0 0
    %1363 = vmatprep.subr.bf16.mxu0 0
    %1364 = vmatpush1.bf16.msra.mxu0 0
    %1365 = vmatprep.subr.bf16.mxu0 0
    %1366 = vmatpush1.bf16.msra.mxu0 %v1258
    %1367 = vmatprep.subr.bf16.mxu0 0
    %1368 = vmatpush2.bf16.msra.mxu0 0
    %1369 = vmatprep.subr.bf16.mxu0 0
    %1370 = vmatpush2.bf16.msra.mxu0 0
    %1371 = vmatprep.subr.bf16.mxu0 0
    %1372 = vmatpush2.bf16.msra.mxu0 0
    %1373 = vmatprep.subr.bf16.mxu0 0
    %1374 = vmatpush2.bf16.msra.mxu0 0
    %1375 = vmatprep.subr.bf16.mxu0 0
    %1376 = vmatpush2.bf16.msra.mxu0 0
    %1377 = vmatprep.subr.bf16.mxu0 0
    %1378 = vmatpush2.bf16.msra.mxu0 0
    %1379 = vmatprep.subr.bf16.mxu0 0
    %1380 = vmatpush2.bf16.msra.mxu0 0
    %1381 = vmatprep.subr.bf16.mxu0 0
    %1382 = vmatpush2.bf16.msra.mxu0 0
    %1383 = vmatprep.mubr.bf16.mxu0 0
    %1384 = vmatmul.mubr.bf16.gmra.mxu0 %v1349
    %v1385 = vpop.f32.mrf.mxu0
    %v1386 = vadd.f32 0.0, %v1385
    %v1387 = vpop.f32.mrf.mxu0
    %v1388 = vpop.f32.mrf.mxu0
    %v1389 = vadd.f32 0.0, %v1388
    %v1390 = vpop.f32.mrf.mxu0
    %1391 = vdwg.mxu0
    %1396 = vrot.lane.b32.xlu0 %v1158, 16
    %v1397 = vpop.permute.xlu0 %1396
    %1398 = vrot.lane.b32.xlu0 %v1161, 16
    %v1399 = vpop.permute.xlu0 %1398
    %1400 = vrot.lane.b32.xlu0 %v1202, 16
    %v1401 = vpop.permute.xlu0 %1400
    %1402 = vrot.lane.b32.xlu0 %v1205, 16
    %v1403 = vpop.permute.xlu0 %1402
    %1412 = vrot.lane.b32.xlu0 %v1250, 32
    %v1413 = vpop.permute.xlu0 %1412
    %1414 = vrot.lane.b32.xlu0 %v1253, 32
    %v1415 = vpop.permute.xlu0 %1414
    %1416 = vrot.lane.b32.xlu0 %v1298, 32
    %v1417 = vpop.permute.xlu0 %1416
    %1418 = vrot.lane.b32.xlu0 %v1301, 32
    %v1419 = vpop.permute.xlu0 %1418
    %1428 = vrot.lane.b32.xlu0 %v1342, 48
    %v1429 = vpop.permute.xlu0 %1428
    %1430 = vrot.lane.b32.xlu0 %v1345, 48
    %v1431 = vpop.permute.xlu0 %1430
    %1432 = vrot.lane.b32.xlu0 %v1386, 48
    %v1433 = vpop.permute.xlu0 %1432
    %1434 = vrot.lane.b32.xlu0 %v1389, 48
    %v1435 = vpop.permute.xlu0 %1434
    %v1440 = vsel %vm443, %v1066, %v1397
    %v1441 = vsel %vm443, %v1069, %v1399
    %v1442 = vsel %vm443, %v1114, %v1401
    %v1443 = vsel %vm443, %v1117, %v1403
    %vm1444 = vcmask 261120
    %v1445 = vsel %vm1444, %v1440, %v1413
    %v1446 = vsel %vm1444, %v1441, %v1415
    %v1447 = vsel %vm1444, %v1442, %v1417
    %v1448 = vsel %vm1444, %v1443, %v1419
    %vm1449 = vcmask 392192
    %v1450 = vsel %vm1449, %v1445, %v1429
    %v1451 = vsel %vm1449, %v1446, %v1431
    %v1452 = vsel %vm1449, %v1447, %v1433
    %v1453 = vsel %vm1449, %v1448, %v1435
    %v1454 = vpack.c.bf16 %v1451, %v1450
    %v1455 = vpack.c.bf16 %v1453, %v1452
    %v1456 = vld [vmem:[%s3] sm:$0xf]
    %v1457 = vld [vmem:[%s3 + $0x4] sm:$0xf]
    %v1458 = vld [vmem:[%s3 + $0x8] sm:$0xf]
    %v1459 = vld [vmem:[%s3 + $0xc] sm:$0xf]
    %v1460 = vld [vmem:[%s3 + $0x10] sm:$0xf]
    %v1461 = vld [vmem:[%s3 + $0x14] sm:$0xf]
    %v1462 = vld [vmem:[%s3 + $0x18] sm:$0xf]
    %v1463 = vld [vmem:[%s3 + $0x1c] sm:$0xf]
    %v1472 = vunpack.c.l.b16 %v1456
    %v1473 = vunpack.c.l.b16 %v1457
    %v1474 = vunpack.c.l.b16 %v1458
    %v1475 = vunpack.c.l.b16 %v1459
    %v1476 = vunpack.c.l.b16 %v1460
    %v1477 = vunpack.c.l.b16 %v1461
    %v1478 = vunpack.c.l.b16 %v1462
    %v1479 = vunpack.c.l.b16 %v1463
    %v1480 = vpack.c.b16 %v1473, %v1472
    %v1481 = vpack.c.b16 %v1475, %v1474
    %v1482 = vpack.c.b16 %v1477, %v1476
    %v1483 = vpack.c.b16 %v1479, %v1478
    %v1489 = vsel %vm194, %v1454, 0
    %v1492 = vsel %vm194, %v1455, 0
    %1494 = vmatprep.subr.bf16.mxu0 0
    %1495 = vmatpush1.bf16.msra.mxu0 0
    %1496 = vmatprep.subr.bf16.mxu0 0
    %1497 = vmatpush1.bf16.msra.mxu0 0
    %1498 = vmatprep.subr.bf16.mxu0 0
    %1499 = vmatpush1.bf16.msra.mxu0 0
    %1500 = vmatprep.subr.bf16.mxu0 0
    %1501 = vmatpush1.bf16.msra.mxu0 0
    %1502 = vmatprep.subr.bf16.mxu0 0
    %1503 = vmatpush1.bf16.msra.mxu0 %v1483
    %1504 = vmatprep.subr.bf16.mxu0 0
    %1505 = vmatpush1.bf16.msra.mxu0 %v1482
    %1506 = vmatprep.subr.bf16.mxu0 0
    %1507 = vmatpush1.bf16.msra.mxu0 %v1481
    %1508 = vmatprep.subr.bf16.mxu0 0
    %1509 = vmatpush1.bf16.msra.mxu0 %v1480
    %1510 = vmatprep.subr.bf16.mxu0 0
    %1511 = vmatpush2.bf16.msra.mxu0 0
    %1512 = vmatprep.subr.bf16.mxu0 0
    %1513 = vmatpush2.bf16.msra.mxu0 0
    %1514 = vmatprep.subr.bf16.mxu0 0
    %1515 = vmatpush2.bf16.msra.mxu0 0
    %1516 = vmatprep.subr.bf16.mxu0 0
    %1517 = vmatpush2.bf16.msra.mxu0 0
    %1518 = vmatprep.subr.bf16.mxu0 0
    %1519 = vmatpush2.bf16.msra.mxu0 0
    %1520 = vmatprep.subr.bf16.mxu0 0
    %1521 = vmatpush2.bf16.msra.mxu0 0
    %1522 = vmatprep.subr.bf16.mxu0 0
    %1523 = vmatpush2.bf16.msra.mxu0 0
    %1524 = vmatprep.subr.bf16.mxu0 0
    %1525 = vmatpush2.bf16.msra.mxu0 0
    %1526 = vmatprep.mubr.bf16.mxu0 0
    %1527 = vmatmul.mubr.bf16.gmra.mxu0 %v1489
    %v1528 = vpop.f32.mrf.mxu0
    %v1529 = vadd.f32 0.0, %v1528
    %v1530 = vpop.f32.mrf.mxu0
    %v1531 = vpop.f32.mrf.mxu0
    %v1532 = vadd.f32 0.0, %v1531
    %v1533 = vpop.f32.mrf.mxu0
    %1534 = vmatprep.mubr.bf16.mxu0 0
    %1535 = vmatmul.mubr.bf16.gmra.mxu0 %v1492
    %v1536 = vpop.f32.mrf.mxu0
    %v1537 = vadd.f32 0.0, %v1536
    %v1538 = vpop.f32.mrf.mxu0
    %v1539 = vpop.f32.mrf.mxu0
    %v1540 = vadd.f32 0.0, %v1539
    %v1541 = vpop.f32.mrf.mxu0
    %1542 = vdwg.mxu0
    %v1543 = vmul.f32 %v1529, %v1529
    %v1544 = vmul.f32 %v1532, %v1532
    %v1545 = vmul.f32 %v1537, %v1537
    %v1546 = vmul.f32 %v1540, %v1540
    %v1547 = vsel %vm194, %v1543, 0.0
    %1548 = vadd.xlane.f32.xlu0 %v1547
    %v1549 = vpop.xlane.xlu0 %1548
    %v1550 = vsel %vm194, %v1544, 0.0
    %1551 = vadd.xlane.f32.xlu0 %v1550
    %v1552 = vpop.xlane.xlu0 %1551
    %v1553 = vsel %vm194, %v1545, 0.0
    %1554 = vadd.xlane.f32.xlu0 %v1553
    %v1555 = vpop.xlane.xlu0 %1554
    %v1556 = vsel %vm194, %v1546, 0.0
    %1557 = vadd.xlane.f32.xlu0 %v1556
    %v1558 = vpop.xlane.xlu0 %1557
    %v1559 = vrcp.pop 64.0
    %v1560 = vmul.f32 %v1549, %v1559
    %v1561 = vmul.f32 %v1552, %v1559
    %v1562 = vmul.f32 %v1555, %v1559
    %v1563 = vmul.f32 %v1558, %v1559
    %v1564 = vadd.f32 %v1560, 1e-05
    %v1565 = vadd.f32 %v1561, 1e-05
    %v1566 = vadd.f32 %v1562, 1e-05
    %v1567 = vadd.f32 %v1563, 1e-05
    %v1568 = vrsqrt.pop %v1564
    %v1569 = vrsqrt.pop %v1565
    %v1570 = vrsqrt.pop %v1566
    %v1571 = vrsqrt.pop %v1567
    %v1572 = vmul.f32 %v1529, %v1568
    %v1573 = vmul.f32 %v1532, %v1569
    %v1574 = vmul.f32 %v1537, %v1570
    %v1575 = vmul.f32 %v1540, %v1571
    %v1576 = vlaneseq
    %v1577 = vshrl.u32 %v1576, 7
    %v1578 = vsub.s32 0, %v1577
    %v1579 = vrot.slane %v41, %v1578
    %v1580 = vmul.f32 %v1572, %v1579
    %v1581 = vmul.f32 %v1573, %v1579
    %v1582 = vmul.f32 %v1574, %v1579
    %v1583 = vmul.f32 %v1575, %v1579
    %v1584 = vadd.f32 %v33, %v1580
    %v1585 = vadd.f32 %v34, %v1581
    %v1586 = vadd.f32 %v35, %v1582
    %v1587 = vadd.f32 %v36, %v1583
    %v1588 = vsub.f32 0.0, %v289
    %v1589 = vsub.f32 0.0, %v291
    %v1590 = vsub.f32 0.0, %v293
    %v1591 = vsub.f32 0.0, %v295
    %v1592 = vsub.f32 0.0, %v299
    %v1593 = vsub.f32 0.0, %v301
    %v1594 = vsub.f32 0.0, %v303
    %v1595 = vsub.f32 0.0, %v305
    %v1596 = vmul.f32 %v1588, 1.442695
    %v1597 = vpow.pop %v1596
    %v1598 = vmul.f32 %v1589, 1.442695
    %v1599 = vpow.pop %v1598
    %v1600 = vmul.f32 %v1590, 1.442695
    %v1601 = vpow.pop %v1600
    %v1602 = vmul.f32 %v1591, 1.442695
    %v1603 = vpow.pop %v1602
    %v1604 = vmul.f32 %v1592, 1.442695
    %v1605 = vpow.pop %v1604
    %v1606 = vmul.f32 %v1593, 1.442695
    %v1607 = vpow.pop %v1606
    %v1608 = vmul.f32 %v1594, 1.442695
    %v1609 = vpow.pop %v1608
    %v1610 = vmul.f32 %v1595, 1.442695
    %v1611 = vpow.pop %v1610
    %v1612 = vadd.f32 %v1597, 1.0
    %v1613 = vadd.f32 %v1599, 1.0
    %v1614 = vadd.f32 %v1601, 1.0
    %v1615 = vadd.f32 %v1603, 1.0
    %v1616 = vadd.f32 %v1605, 1.0
    %v1617 = vadd.f32 %v1607, 1.0
    %v1618 = vadd.f32 %v1609, 1.0
    %v1619 = vadd.f32 %v1611, 1.0
    %v1620 = vrcp.pop %v1612
    %v1621 = vrcp.pop %v1613
    %v1622 = vrcp.pop %v1614
    %v1623 = vrcp.pop %v1615
    %v1624 = vrcp.pop %v1616
    %v1625 = vrcp.pop %v1617
    %v1626 = vrcp.pop %v1618
    %v1627 = vrcp.pop %v1619
    %v1628 = vmul.f32 %v289, %v1620
    %v1629 = vmul.f32 %v291, %v1621
    %v1630 = vmul.f32 %v293, %v1622
    %v1631 = vmul.f32 %v295, %v1623
    %v1632 = vmul.f32 %v299, %v1624
    %v1633 = vmul.f32 %v301, %v1625
    %v1634 = vmul.f32 %v303, %v1626
    %v1635 = vmul.f32 %v305, %v1627
    %v1636 = vmul.f32 %v1628, %v342
    %v1637 = vmul.f32 %v1629, %v344
    %v1638 = vmul.f32 %v1630, %v346
    %v1639 = vmul.f32 %v1631, %v348
    %v1640 = vmul.f32 %v1632, %v352
    %v1641 = vmul.f32 %v1633, %v354
    %v1642 = vmul.f32 %v1634, %v356
    %v1643 = vmul.f32 %v1635, %v358
    %v1644 = vpack.c.bf16 %v1638, %v1636
    %v1645 = vpack.c.bf16 %v1639, %v1637
    %v1646 = vpack.c.bf16 %v1642, %v1640
    %v1647 = vpack.c.bf16 %v1643, %v1641
    %v1648 = vld [vmem:[%s3 + $0x20] sm:$0xf]
    %v1649 = vld [vmem:[%s3 + $0x24] sm:$0xf]
    %v1650 = vld [vmem:[%s3 + $0x28] sm:$0xf]
    %v1651 = vld [vmem:[%s3 + $0x2c] sm:$0xf]
    %v1652 = vld [vmem:[%s3 + $0x30] sm:$0xf]
    %v1653 = vld [vmem:[%s3 + $0x34] sm:$0xf]
    %v1654 = vld [vmem:[%s3 + $0x38] sm:$0xf]
    %v1655 = vld [vmem:[%s3 + $0x3c] sm:$0xf]
    %v1656 = vld [vmem:[%s3 + $0x40] sm:$0xf]
    %v1657 = vld [vmem:[%s3 + $0x44] sm:$0xf]
    %v1658 = vld [vmem:[%s3 + $0x48] sm:$0xf]
    %v1659 = vld [vmem:[%s3 + $0x4c] sm:$0xf]
    %v1660 = vld [vmem:[%s3 + $0x50] sm:$0xf]
    %v1661 = vld [vmem:[%s3 + $0x54] sm:$0xf]
    %v1662 = vld [vmem:[%s3 + $0x58] sm:$0xf]
    %v1663 = vld [vmem:[%s3 + $0x5c] sm:$0xf]
    %v1664 = vld [vmem:[%s3 + $0x60] sm:$0xf]
    %v1665 = vld [vmem:[%s3 + $0x64] sm:$0xf]
    %v1666 = vld [vmem:[%s3 + $0x68] sm:$0xf]
    %v1667 = vld [vmem:[%s3 + $0x6c] sm:$0xf]
    %v1668 = vld [vmem:[%s3 + $0x70] sm:$0xf]
    %v1669 = vld [vmem:[%s3 + $0x74] sm:$0xf]
    %v1670 = vld [vmem:[%s3 + $0x78] sm:$0xf]
    %v1671 = vld [vmem:[%s3 + $0x7c] sm:$0xf]
    %v1672 = vld [vmem:[%s3 + $0x80] sm:$0xf]
    %v1673 = vld [vmem:[%s3 + $0x84] sm:$0xf]
    %v1674 = vld [vmem:[%s3 + $0x88] sm:$0xf]
    %v1675 = vld [vmem:[%s3 + $0x8c] sm:$0xf]
    %v1676 = vld [vmem:[%s3 + $0x90] sm:$0xf]
    %v1677 = vld [vmem:[%s3 + $0x94] sm:$0xf]
    %v1678 = vld [vmem:[%s3 + $0x98] sm:$0xf]
    %v1679 = vld [vmem:[%s3 + $0x9c] sm:$0xf]
    %v1712 = vunpack.c.l.b16 %v1648
    %v1713 = vunpack.c.l.b16 %v1649
    %v1714 = vunpack.c.l.b16 %v1650
    %v1715 = vunpack.c.l.b16 %v1651
    %v1716 = vunpack.c.l.b16 %v1652
    %v1717 = vunpack.c.l.b16 %v1653
    %v1718 = vunpack.c.l.b16 %v1654
    %v1719 = vunpack.c.l.b16 %v1655
    %v1720 = vunpack.c.l.b16 %v1656
    %v1721 = vunpack.c.l.b16 %v1657
    %v1722 = vunpack.c.l.b16 %v1658
    %v1723 = vunpack.c.l.b16 %v1659
    %v1724 = vunpack.c.l.b16 %v1660
    %v1725 = vunpack.c.l.b16 %v1661
    %v1726 = vunpack.c.l.b16 %v1662
    %v1727 = vunpack.c.l.b16 %v1663
    %v1728 = vunpack.c.l.b16 %v1664
    %v1729 = vunpack.c.l.b16 %v1665
    %v1730 = vunpack.c.l.b16 %v1666
    %v1731 = vunpack.c.l.b16 %v1667
    %v1732 = vunpack.c.l.b16 %v1668
    %v1733 = vunpack.c.l.b16 %v1669
    %v1734 = vunpack.c.l.b16 %v1670
    %v1735 = vunpack.c.l.b16 %v1671
    %v1736 = vunpack.c.l.b16 %v1672
    %v1737 = vunpack.c.l.b16 %v1673
    %v1738 = vunpack.c.l.b16 %v1674
    %v1739 = vunpack.c.l.b16 %v1675
    %v1740 = vunpack.c.l.b16 %v1676
    %v1741 = vunpack.c.l.b16 %v1677
    %v1742 = vunpack.c.l.b16 %v1678
    %v1743 = vunpack.c.l.b16 %v1679
    %v1744 = vpack.c.b16 %v1713, %v1712
    %v1745 = vpack.c.b16 %v1715, %v1714
    %v1746 = vpack.c.b16 %v1717, %v1716
    %v1747 = vpack.c.b16 %v1719, %v1718
    %v1748 = vpack.c.b16 %v1721, %v1720
    %v1749 = vpack.c.b16 %v1723, %v1722
    %v1750 = vpack.c.b16 %v1725, %v1724
    %v1751 = vpack.c.b16 %v1727, %v1726
    %v1752 = vpack.c.b16 %v1729, %v1728
    %v1753 = vpack.c.b16 %v1731, %v1730
    %v1754 = vpack.c.b16 %v1733, %v1732
    %v1755 = vpack.c.b16 %v1735, %v1734
    %v1756 = vpack.c.b16 %v1737, %v1736
    %v1757 = vpack.c.b16 %v1739, %v1738
    %v1758 = vpack.c.b16 %v1741, %v1740
    %v1759 = vpack.c.b16 %v1743, %v1742
    %1776 = vmatprep.subr.bf16.mxu0 0
    %1777 = vmatpush1.bf16.msra.mxu0 %v1751
    %1778 = vmatprep.subr.bf16.mxu0 0
    %1779 = vmatpush1.bf16.msra.mxu0 %v1750
    %1780 = vmatprep.subr.bf16.mxu0 0
    %1781 = vmatpush1.bf16.msra.mxu0 %v1749
    %1782 = vmatprep.subr.bf16.mxu0 0
    %1783 = vmatpush1.bf16.msra.mxu0 %v1748
    %1784 = vmatprep.subr.bf16.mxu0 0
    %1785 = vmatpush1.bf16.msra.mxu0 %v1747
    %1786 = vmatprep.subr.bf16.mxu0 0
    %1787 = vmatpush1.bf16.msra.mxu0 %v1746
    %1788 = vmatprep.subr.bf16.mxu0 0
    %1789 = vmatpush1.bf16.msra.mxu0 %v1745
    %1790 = vmatprep.subr.bf16.mxu0 0
    %1791 = vmatpush1.bf16.msra.mxu0 %v1744
    %1792 = vmatprep.subr.bf16.mxu0 0
    %1793 = vmatpush2.bf16.msra.mxu0 %v1759
    %1794 = vmatprep.subr.bf16.mxu0 0
    %1795 = vmatpush2.bf16.msra.mxu0 %v1758
    %1796 = vmatprep.subr.bf16.mxu0 0
    %1797 = vmatpush2.bf16.msra.mxu0 %v1757
    %1798 = vmatprep.subr.bf16.mxu0 0
    %1799 = vmatpush2.bf16.msra.mxu0 %v1756
    %1800 = vmatprep.subr.bf16.mxu0 0
    %1801 = vmatpush2.bf16.msra.mxu0 %v1755
    %1802 = vmatprep.subr.bf16.mxu0 0
    %1803 = vmatpush2.bf16.msra.mxu0 %v1754
    %1804 = vmatprep.subr.bf16.mxu0 0
    %1805 = vmatpush2.bf16.msra.mxu0 %v1753
    %1806 = vmatprep.subr.bf16.mxu0 0
    %1807 = vmatpush2.bf16.msra.mxu0 %v1752
    %1808 = vmatprep.mubr.bf16.mxu0 %v1645
    %1809 = vmatmul.mubr.bf16.gmra.mxu0 %v1644
    %v1810 = vpop.f32.mrf.mxu0
    %v1811 = vadd.f32 0.0, %v1810
    %v1812 = vpop.f32.mrf.mxu0
    %v1813 = vpop.f32.mrf.mxu0
    %v1814 = vadd.f32 0.0, %v1813
    %v1815 = vpop.f32.mrf.mxu0
    %1816 = vmatprep.mubr.bf16.mxu0 %v1647
    %1817 = vmatmul.mubr.bf16.gmra.mxu0 %v1646
    %v1818 = vpop.f32.mrf.mxu0
    %v1819 = vadd.f32 0.0, %v1818
    %v1820 = vpop.f32.mrf.mxu0
    %v1821 = vpop.f32.mrf.mxu0
    %v1822 = vadd.f32 0.0, %v1821
    %v1823 = vpop.f32.mrf.mxu0
    %1824 = vdwg.mxu0
    %v1825 = vmul.f32 %v1811, %v1811
    %v1826 = vmul.f32 %v1814, %v1814
    %v1827 = vmul.f32 %v1819, %v1819
    %v1828 = vmul.f32 %v1822, %v1822
    %v1829 = vsel %vm194, %v1825, 0.0
    %1830 = vadd.xlane.f32.xlu0 %v1829
    %v1831 = vpop.xlane.xlu0 %1830
    %v1832 = vsel %vm194, %v1826, 0.0
    %1833 = vadd.xlane.f32.xlu0 %v1832
    %v1834 = vpop.xlane.xlu0 %1833
    %v1835 = vsel %vm194, %v1827, 0.0
    %1836 = vadd.xlane.f32.xlu0 %v1835
    %v1837 = vpop.xlane.xlu0 %1836
    %v1838 = vsel %vm194, %v1828, 0.0
    %1839 = vadd.xlane.f32.xlu0 %v1838
    %v1840 = vpop.xlane.xlu0 %1839
    %v1841 = vmul.f32 %v1831, %v1559
    %v1842 = vmul.f32 %v1834, %v1559
    %v1843 = vmul.f32 %v1837, %v1559
    %v1844 = vmul.f32 %v1840, %v1559
    %v1845 = vadd.f32 %v1841, 1e-05
    %v1846 = vadd.f32 %v1842, 1e-05
    %v1847 = vadd.f32 %v1843, 1e-05
    %v1848 = vadd.f32 %v1844, 1e-05
    %v1849 = vrsqrt.pop %v1845
    %v1850 = vrsqrt.pop %v1846
    %v1851 = vrsqrt.pop %v1847
    %v1852 = vrsqrt.pop %v1848
    %v1853 = vmul.f32 %v1811, %v1849
    %v1854 = vmul.f32 %v1814, %v1850
    %v1855 = vmul.f32 %v1819, %v1851
    %v1856 = vmul.f32 %v1822, %v1852
    %v1857 = vlaneseq
    %v1858 = vshrl.u32 %v1857, 7
    %v1859 = vsub.s32 0, %v1858
    %v1860 = vrot.slane %v47, %v1859
    %v1861 = vmul.f32 %v1853, %v1860
    %v1862 = vmul.f32 %v1854, %v1860
    %v1863 = vmul.f32 %v1855, %v1860
    %v1864 = vmul.f32 %v1856, %v1860
    %v1865 = vadd.f32 %v1584, %v1861
    %v1866 = vadd.f32 %v1585, %v1862
    %v1867 = vadd.f32 %v1586, %v1863
    %v1868 = vadd.f32 %v1587, %v1864
    %1869 = vst.msk [vmem:[#allocation5] sm:$0xff] %vm194, %v1865
    %1870 = vst.msk [vmem:[#allocation5 + $0x8] sm:$0xff] %vm194, %v1866
    %1871 = vst.msk [vmem:[#allocation5 + $0x10] sm:$0xff] %vm194, %v1867
    %1872 = vst.msk [vmem:[#allocation5 + $0x18] sm:$0xff] %vm194, %v1868
    // Predicated region
    $region22: #{transformer_block.1} parent=1 // pred_check
      _
    $region23: #{transformer_block.1} parent=1 // pred_check_branch
      %1874 = sbr.rel (0) target = $region25
    $region24: #{transformer_block.1} parent=1 // pred_region
      %s1876 = ssub.s32 512, 512
      %1877 = vsyncadd [#allocation4], %s1876
      %s1878 = sshll.u32 [#allocation5], 4
      %s1879 = int_to_ptr.vmem [resolvable:$true] %s1878
      %1884 = dma.vmem_to_hbm [thread:$0]  %s1879, 512, %s4, [#allocation4], 128, 128, 8
    $region25: #{transformer_block.1} parent=1 // pred_fallthru
      _
    // Predicated region
    $region26: #{transformer_block.1} parent=1 // pred_check
      _
    $region27: #{transformer_block.1} parent=1 // pred_check_branch
      %1886 = sbr.rel (0) target = $region29
    $region28: #{transformer_block.1} parent=1 // pred_region
      %1887 = dma.done [#allocation4], 512
    $region29: #{transformer_block.1} parent=1 // pred_fallthru
      _
    %1888 = vsyncpa [#allocation3], 1
    %1889 = vsyncpa [#allocation4], 1

</llo_original>
